<compile_context>
chip_gen: v7x
topology: tpu7x:2x2x1
jax: 0.10.0
libtpu: 0.0.40
codegen_flags: <defaults>
</compile_context>

<pallas_src>
import functools

import jax
import jax.numpy as jnp
from jax import lax
from jax.experimental import pallas as pl
from jax.experimental.pallas import tpu as pltpu


def _layernorm(x, gamma, beta, eps=1e-5):
    # LayerNorm over last dim, biased variance, f32 stats (matches torch.nn.LayerNorm).
    mean = jnp.mean(x, axis=-1, keepdims=True)
    var = jnp.mean((x - mean) ** 2, axis=-1, keepdims=True)
    return (x - mean) * lax.rsqrt(var + eps) * gamma + beta


def encoder_block_kernel(
    x_ref,                      # (M, E)  f32, M = B*S
    wqkv_ref, bqkv_ref,         # (E, 3E) bf16, (1, 3E) f32   (fused Q/K/V projection)
    wo_ref, bo_ref,             # (E, E) bf16, (1, E) f32
    g1_ref, b1_ref,             # (1, E) f32  layernorm1 gamma/beta
    w1_ref, bb1_ref,            # (E, F) bf16, (1, F) f32
    w2_ref, bb2_ref,            # (F, E) bf16, (1, E) f32
    g2_ref, b2_ref,             # (1, E) f32  layernorm2 gamma/beta
    o_ref,                      # (M, E) f32
    *, batch, seq_len, num_heads,
):
    f32 = jnp.float32
    bf16 = jnp.bfloat16

    x = x_ref[...]              # (M, E) f32
    M, E = x.shape
    S = seq_len
    Dh = E // num_heads
    scale = 1.0 / (Dh ** 0.5)

    # --- fused Q/K/V projection over all B*S rows: one wide MXU matmul, f32 accumulate ---
    qkv = jnp.dot(x.astype(bf16), wqkv_ref[...],
                  preferred_element_type=f32) + bqkv_ref[...]          # (M, 3E)
    q = qkv[:, 0 * E:1 * E]
    k = qkv[:, 1 * E:2 * E]
    v = qkv[:, 2 * E:3 * E]

    # --- multi-head self-attention (no mask, eval).  Scores/PV are per (batch, head);
    #     K-transpose absorbed into the MXU contraction via dot_general. ---
    ctx_rows = []
    for b in range(batch):                       # static, small -> unrolled
        r0 = b * S
        heads = []
        for h in range(num_heads):               # static, small -> unrolled
            c0 = h * Dh
            qh = q[r0:r0 + S, c0:c0 + Dh].astype(bf16)   # (S, Dh)
            kh = k[r0:r0 + S, c0:c0 + Dh].astype(bf16)
            vh = v[r0:r0 + S, c0:c0 + Dh].astype(bf16)
            s = lax.dot_general(qh, kh, (((1,), (1,)), ((), ())),
                                preferred_element_type=f32) * scale    # (S, S) f32
            s = s - jnp.max(s, axis=-1, keepdims=True)
            p = jnp.exp(s)
            inv = pl.reciprocal(jnp.sum(p, axis=-1, keepdims=True), approx=True)
            p = p * inv
            heads.append(jnp.dot(p.astype(bf16), vh,
                                 preferred_element_type=f32))          # (S, Dh)
        ctx_rows.append(jnp.concatenate(heads, axis=-1))               # (S, E)
    ctx = jnp.concatenate(ctx_rows, axis=0)                            # (M, E)

    # --- single output projection: one (M,E) @ (E,E) matmul, K = E contraction depth ---
    attn_out = jnp.dot(ctx.astype(bf16), wo_ref[...],
                       preferred_element_type=f32) + bo_ref[...]

    # --- Add & Norm 1 (dropout = identity in eval) ---
    h1 = _layernorm(x + attn_out, g1_ref[...], b1_ref[...])

    # --- FeedForward: Linear -> ReLU -> Linear (dropout = identity) ---
    ff = jnp.dot(h1.astype(bf16), w1_ref[...], preferred_element_type=f32) + bb1_ref[...]
    ff = jnp.maximum(ff, 0.0)
    ff = jnp.dot(ff.astype(bf16), w2_ref[...], preferred_element_type=f32) + bb2_ref[...]

    # --- Add & Norm 2 ---
    out = _layernorm(h1 + ff, g2_ref[...], b2_ref[...])
    o_ref[...] = out.astype(o_ref.dtype)


def prepare_kernel_params(params):
    """One-time weight fusion + bf16 casting (NOT in the per-call path)."""
    bf16 = jnp.bfloat16
    return {
        "wqkv": jnp.concatenate([params["wq"], params["wk"], params["wv"]],
                                axis=1).astype(bf16),                       # (E, 3E)
        "bqkv": jnp.concatenate([params["bq"], params["bk"], params["bv"]], axis=1),
        "wo": params["wo"].astype(bf16), "bo": params["bo"],
        "ln1_g": params["ln1_g"], "ln1_b": params["ln1_b"],
        "w1": params["w1"].astype(bf16), "b1": params["b1"],
        "w2": params["w2"].astype(bf16), "b2": params["b2"],
        "ln2_g": params["ln2_g"], "ln2_b": params["ln2_b"],
    }


def transformer_encoder_block(x, kparams, num_heads):
    B, S, E = x.shape
    F = kparams["w1"].shape[1]
    M = B * S
    x2 = x.reshape(M, E)        # fold batch into the row dimension (free, row-major)

    def act_spec(shape):
        return pl.BlockSpec(shape, lambda i, n=len(shape): (0,) * n)

    def weight_spec(shape):
        # Constant index_map -> single DMA; single-buffer where the API allows it
        # (halves resident weight VMEM, important on v7x's 64 MiB TensorCore).
        kwargs = {}
        if hasattr(pl, "Buffered"):
            kwargs["pipeline_mode"] = pl.Buffered(1)
        return pl.BlockSpec(shape, lambda i, n=len(shape): (0,) * n, **kwargs)

    in_specs = [
        act_spec((M, E)),                               # x (whole folded batch)
        weight_spec((E, 3 * E)), act_spec((1, 3 * E)),  # wqkv, bqkv
        weight_spec((E, E)), act_spec((1, E)),          # wo, bo
        act_spec((1, E)), act_spec((1, E)),             # ln1 gamma, beta
        weight_spec((E, F)), act_spec((1, F)),          # w1, b1
        weight_spec((F, E)), act_spec((1, E)),          # w2, b2
        act_spec((1, E)), act_spec((1, E)),             # ln2 gamma, beta
    ]

    # Explicit VMEM budget: single-buffered weights + activations + headroom,
    # capped at 75% of this generation's VMEM capacity (never all of v7x's 64 MiB).
    def nbytes(shape, itemsize):
        n = 1
        for d in shape:
            n *= d
        return n * itemsize

    weight_bytes = (nbytes((E, 3 * E), 2) + nbytes((E, E), 2)
                    + nbytes((E, F), 2) + nbytes((F, E), 2))
    small_bytes = nbytes((1, 3 * E), 4) + nbytes((1, F), 4) + 6 * nbytes((1, E), 4)
    act_bytes = 4 * (M * 3 * E + 6 * M * E + M * F + num_heads * S * S)
    io_bytes = 2 * 2 * nbytes((M, E), 4)
    needed = weight_bytes + 2 * small_bytes + 2 * act_bytes + io_bytes + (2 << 20)

    try:
        vmem_cap = int(pltpu.get_tpu_info().vmem_capacity_bytes)
    except Exception:
        vmem_cap = 64 << 20
    vmem_limit = int(min(int(0.75 * vmem_cap), max(8 << 20, needed)))

    kernel = functools.partial(encoder_block_kernel,
                               batch=B, seq_len=S, num_heads=num_heads)
    out = pl.pallas_call(
        kernel,
        out_shape=jax.ShapeDtypeStruct((M, E), jnp.float32),
        grid=(1,),                                       # single step: whole batch at once
        in_specs=in_specs,
        out_specs=act_spec((M, E)),
        compiler_params=pltpu.CompilerParams(
            dimension_semantics=("arbitrary",),          # 1 step -> nothing to parallelize
            vmem_limit_bytes=vmem_limit),
    )(
        x2,
        kparams["wqkv"], kparams["bqkv"],
        kparams["wo"], kparams["bo"],
        kparams["ln1_g"], kparams["ln1_b"],
        kparams["w1"], kparams["b1"],
        kparams["w2"], kparams["b2"],
        kparams["ln2_g"], kparams["ln2_b"],
    )
    return out.reshape(B, S, E)


def init_params(key, embed_dim, ff_dim):
    # Deterministic synthetic parameters (shapes from the PyTorch module __init__).
    ks = jax.random.split(key, 12)
    s = 0.02
    E, F = embed_dim, ff_dim
    # PyTorch MultiheadAttention stores in_proj_weight (3E, E) and computes x @ W^T;
    # we store the transposed (E, E) slices directly so the kernel right-multiplies.
    return {
        "wq": jax.random.normal(ks[0], (E, E), jnp.float32) * s,
        "wk": jax.random.normal(ks[1], (E, E), jnp.float32) * s,
        "wv": jax.random.normal(ks[2], (E, E), jnp.float32) * s,
        "bq": jax.random.normal(ks[3], (1, E), jnp.float32) * s,
        "bk": jax.random.normal(ks[4], (1, E), jnp.float32) * s,
        "bv": jax.random.normal(ks[5], (1, E), jnp.float32) * s,
        "wo": jax.random.normal(ks[6], (E, E), jnp.float32) * s,
        "bo": jax.random.normal(ks[7], (1, E), jnp.float32) * s,
        "ln1_g": jnp.ones((1, E), jnp.float32),
        "ln1_b": jnp.zeros((1, E), jnp.float32),
        "w1": jax.random.normal(ks[8], (E, F), jnp.float32) * s,
        "b1": jax.random.normal(ks[9], (1, F), jnp.float32) * s,
        "w2": jax.random.normal(ks[10], (F, E), jnp.float32) * s,
        "b2": jax.random.normal(ks[11], (1, E), jnp.float32) * s,
        "ln2_g": jnp.ones((1, E), jnp.float32),
        "ln2_b": jnp.zeros((1, E), jnp.float32),
    }


def reference_block(x, p, num_heads):
    # Pure-JAX f32 reference with identical math for a correctness check.
    B, S, E = x.shape
    Dh = E // num_heads
    q = x @ p["wq"] + p["bq"]
    k = x @ p["wk"] + p["bk"]
    v = x @ p["wv"] + p["bv"]
    qh = q.reshape(B, S, num_heads, Dh).transpose(0, 2, 1, 3)
    kh = k.reshape(B, S, num_heads, Dh).transpose(0, 2, 1, 3)
    vh = v.reshape(B, S, num_heads, Dh).transpose(0, 2, 1, 3)
    scores = jnp.einsum("bhsd,bhtd->bhst", qh, kh) / (Dh ** 0.5)
    pmat = jax.nn.softmax(scores, axis=-1)
    attn = jnp.einsum("bhst,bhtd->bhsd", pmat, vh).transpose(0, 2, 1, 3).reshape(B, S, E)
    attn = attn @ p["wo"] + p["bo"]

    def ln(y, g, b, eps=1e-5):
        m = y.mean(-1, keepdims=True)
        vv = ((y - m) ** 2).mean(-1, keepdims=True)
        return (y - m) * lax.rsqrt(vv + eps) * g + b

    h1 = ln(x + attn, p["ln1_g"], p["ln1_b"])
    ff = jnp.maximum(h1 @ p["w1"] + p["b1"], 0.0) @ p["w2"] + p["b2"]
    return ln(h1 + ff, p["ln2_g"], p["ln2_b"])


if __name__ == "__main__":
    # Small shapes consistent with the module: (batch, seq, embed) = (2, 8, 32),
    # num_heads=4, ff_dim=64.
    B, S, E, H, F = 2, 8, 32, 4, 64
    key = jax.random.PRNGKey(0)
    kx, kp = jax.random.split(key)
    x = jax.random.normal(kx, (B, S, E), jnp.float32)
    params = init_params(kp, E, F)
    kparams = prepare_kernel_params(params)      # one-time fusion + bf16 cast, outside the call

    out = transformer_encoder_block(x, kparams, num_heads=H)
    out = jax.block_until_ready(out)

    ref = reference_block(x, params, H)
    assert out.shape == (B, S, E)
    assert bool(jnp.all(jnp.isfinite(out)))
    err = float(jnp.max(jnp.abs(out - ref)))
    # bf16 matmul inputs + approx reciprocal vs. an f32 reference -> relaxed tolerance.
    assert err < 2e-2, f"mismatch vs JAX reference: max abs err = {err}"
    print("KERNEL_OK")
</pallas_src>

<mosaic_0001>
module attributes {stable_mosaic.version = 11 : i64} {
  func.func @encoder_block_kernel(%arg0: i32, %arg1: memref<16x32xf32, #tpu.memory_space<vmem>>, %arg2: memref<32x96xbf16, #tpu.memory_space<vmem>>, %arg3: memref<1x96xf32, #tpu.memory_space<vmem>>, %arg4: memref<32x32xbf16, #tpu.memory_space<vmem>>, %arg5: memref<1x32xf32, #tpu.memory_space<vmem>>, %arg6: memref<1x32xf32, #tpu.memory_space<vmem>>, %arg7: memref<1x32xf32, #tpu.memory_space<vmem>>, %arg8: memref<32x64xbf16, #tpu.memory_space<vmem>>, %arg9: memref<1x64xf32, #tpu.memory_space<vmem>>, %arg10: memref<64x32xbf16, #tpu.memory_space<vmem>>, %arg11: memref<1x32xf32, #tpu.memory_space<vmem>>, %arg12: memref<1x32xf32, #tpu.memory_space<vmem>>, %arg13: memref<1x32xf32, #tpu.memory_space<vmem>>, %arg14: memref<16x32xf32, #tpu.memory_space<vmem>>) attributes {dimension_semantics = [#tpu.dimension_semantics<arbitrary>], iteration_bounds = array<i64: 1>, scalar_prefetch = 0 : i64, scratch_operands = 0 : i64, tpu.core_type = #tpu.core_type<tc>, window_params = [{pipeline_mode = #tpu.pipeline_mode<synchronous>, transform_indices = @transform_0, window_bounds = array<i64: 16, 32>}, {pipeline_mode = #tpu.pipeline_mode<synchronous>, transform_indices = @transform_1, window_bounds = array<i64: 32, 96>}, {pipeline_mode = #tpu.pipeline_mode<synchronous>, transform_indices = @transform_2, window_bounds = array<i64: 1, 96>}, {pipeline_mode = #tpu.pipeline_mode<synchronous>, transform_indices = @transform_3, window_bounds = array<i64: 32, 32>}, {pipeline_mode = #tpu.pipeline_mode<synchronous>, transform_indices = @transform_4, window_bounds = array<i64: 1, 32>}, {pipeline_mode = #tpu.pipeline_mode<synchronous>, transform_indices = @transform_5, window_bounds = array<i64: 1, 32>}, {pipeline_mode = #tpu.pipeline_mode<synchronous>, transform_indices = @transform_6, window_bounds = array<i64: 1, 32>}, {pipeline_mode = #tpu.pipeline_mode<synchronous>, transform_indices = @transform_7, window_bounds = array<i64: 32, 64>}, {pipeline_mode = #tpu.pipeline_mode<synchronous>, transform_indices = @transform_8, window_bounds = array<i64: 1, 64>}, {pipeline_mode = #tpu.pipeline_mode<synchronous>, transform_indices = @transform_9, window_bounds = array<i64: 64, 32>}, {pipeline_mode = #tpu.pipeline_mode<synchronous>, transform_indices = @transform_10, window_bounds = array<i64: 1, 32>}, {pipeline_mode = #tpu.pipeline_mode<synchronous>, transform_indices = @transform_11, window_bounds = array<i64: 1, 32>}, {pipeline_mode = #tpu.pipeline_mode<synchronous>, transform_indices = @transform_12, window_bounds = array<i64: 1, 32>}, {pipeline_mode = #tpu.pipeline_mode<synchronous>, transform_indices = @transform_13, window_bounds = array<i64: 16, 32>}]} {
    %c0 = arith.constant 0 : index
    %c0_0 = arith.constant 0 : index
    %0 = vector.load %arg1[%c0, %c0_0] : memref<16x32xf32, #tpu.memory_space<vmem>>, vector<16x32xf32>
    %1 = arith.truncf %0 : vector<16x32xf32> to vector<16x32xbf16>
    %c0_1 = arith.constant 0 : index
    %c0_2 = arith.constant 0 : index
    %2 = vector.load %arg2[%c0_1, %c0_2] : memref<32x96xbf16, #tpu.memory_space<vmem>>, vector<32x96xbf16>
    %cst = arith.constant dense<0.000000e+00> : vector<16x96xf32>
    %3 = tpu.matmul %1, %2, %cst {dimension_numbers = #tpu.dot_dimension_numbers<[1], [0], [0], [1], [0, 0, 1, 1], [], []>} : vector<16x32xbf16>, vector<32x96xbf16>, vector<16x96xf32> -> vector<16x96xf32>
    %c0_3 = arith.constant 0 : index
    %c0_4 = arith.constant 0 : index
    %4 = vector.load %arg3[%c0_3, %c0_4] : memref<1x96xf32, #tpu.memory_space<vmem>>, vector<1x96xf32>
    %5 = vector.broadcast %4 : vector<1x96xf32> to vector<16x96xf32>
    %6 = arith.addf %3, %5 : vector<16x96xf32>
    %7 = vector.extract_strided_slice %6 {offsets = [0, 0], sizes = [16, 32], strides = [1, 1]} : vector<16x96xf32> to vector<16x32xf32>
    %8 = vector.extract_strided_slice %6 {offsets = [0, 32], sizes = [16, 32], strides = [1, 1]} : vector<16x96xf32> to vector<16x32xf32>
    %9 = vector.extract_strided_slice %6 {offsets = [0, 64], sizes = [16, 32], strides = [1, 1]} : vector<16x96xf32> to vector<16x32xf32>
    %10 = vector.extract_strided_slice %7 {offsets = [0, 0], sizes = [8, 8], strides = [1, 1]} : vector<16x32xf32> to vector<8x8xf32>
    %11 = arith.truncf %10 : vector<8x8xf32> to vector<8x8xbf16>
    %12 = vector.extract_strided_slice %8 {offsets = [0, 0], sizes = [8, 8], strides = [1, 1]} : vector<16x32xf32> to vector<8x8xf32>
    %13 = arith.truncf %12 : vector<8x8xf32> to vector<8x8xbf16>
    %14 = vector.extract_strided_slice %9 {offsets = [0, 0], sizes = [8, 8], strides = [1, 1]} : vector<16x32xf32> to vector<8x8xf32>
    %15 = arith.truncf %14 : vector<8x8xf32> to vector<8x8xbf16>
    %cst_5 = arith.constant dense<0.000000e+00> : vector<8x8xf32>
    %16 = tpu.matmul %11, %13, %cst_5 {dimension_numbers = #tpu.dot_dimension_numbers<[1], [1], [0], [0], [0, 0, 1, 0], [], []>} : vector<8x8xbf16>, vector<8x8xbf16>, vector<8x8xf32> -> vector<8x8xf32>
    %cst_6 = arith.constant 0.353553385 : f32
    %17 = vector.broadcast %cst_6 : f32 to vector<8x8xf32>
    %18 = arith.mulf %16, %17 : vector<8x8xf32>
    %cst_7 = arith.constant dense<0xFF800000> : vector<8xf32>
    %19 = vector.multi_reduction <maximumf>, %18, %cst_7 [1] : vector<8x8xf32> to vector<8xf32>
    %20 = vector.shape_cast %19 : vector<8xf32> to vector<8x1xf32>
    %21 = vector.broadcast %20 : vector<8x1xf32> to vector<8x8xf32>
    %22 = arith.subf %18, %21 : vector<8x8xf32>
    %23 = math.exp %22 : vector<8x8xf32>
    %cst_8 = arith.constant dense<0.000000e+00> : vector<8xf32>
    %24 = vector.multi_reduction <add>, %23, %cst_8 [1] : vector<8x8xf32> to vector<8xf32>
    %25 = vector.shape_cast %24 : vector<8xf32> to vector<8x1xf32>
    %26 = tpu.reciprocal %25 {approx = true} : vector<8x1xf32> -> vector<8x1xf32>
    %27 = vector.broadcast %26 : vector<8x1xf32> to vector<8x8xf32>
    %28 = arith.mulf %23, %27 : vector<8x8xf32>
    %29 = arith.truncf %28 : vector<8x8xf32> to vector<8x8xbf16>
    %cst_9 = arith.constant dense<0.000000e+00> : vector<8x8xf32>
    %30 = tpu.matmul %29, %15, %cst_9 {dimension_numbers = #tpu.dot_dimension_numbers<[1], [0], [0], [1], [0, 0, 1, 1], [], []>} : vector<8x8xbf16>, vector<8x8xbf16>, vector<8x8xf32> -> vector<8x8xf32>
    %31 = vector.extract_strided_slice %7 {offsets = [0, 8], sizes = [8, 8], strides = [1, 1]} : vector<16x32xf32> to vector<8x8xf32>
    %32 = arith.truncf %31 : vector<8x8xf32> to vector<8x8xbf16>
    %33 = vector.extract_strided_slice %8 {offsets = [0, 8], sizes = [8, 8], strides = [1, 1]} : vector<16x32xf32> to vector<8x8xf32>
    %34 = arith.truncf %33 : vector<8x8xf32> to vector<8x8xbf16>
    %35 = vector.extract_strided_slice %9 {offsets = [0, 8], sizes = [8, 8], strides = [1, 1]} : vector<16x32xf32> to vector<8x8xf32>
    %36 = arith.truncf %35 : vector<8x8xf32> to vector<8x8xbf16>
    %cst_10 = arith.constant dense<0.000000e+00> : vector<8x8xf32>
    %37 = tpu.matmul %32, %34, %cst_10 {dimension_numbers = #tpu.dot_dimension_numbers<[1], [1], [0], [0], [0, 0, 1, 0], [], []>} : vector<8x8xbf16>, vector<8x8xbf16>, vector<8x8xf32> -> vector<8x8xf32>
    %cst_11 = arith.constant 0.353553385 : f32
    %38 = vector.broadcast %cst_11 : f32 to vector<8x8xf32>
    %39 = arith.mulf %37, %38 : vector<8x8xf32>
    %cst_12 = arith.constant dense<0xFF800000> : vector<8xf32>
    %40 = vector.multi_reduction <maximumf>, %39, %cst_12 [1] : vector<8x8xf32> to vector<8xf32>
    %41 = vector.shape_cast %40 : vector<8xf32> to vector<8x1xf32>
    %42 = vector.broadcast %41 : vector<8x1xf32> to vector<8x8xf32>
    %43 = arith.subf %39, %42 : vector<8x8xf32>
    %44 = math.exp %43 : vector<8x8xf32>
    %cst_13 = arith.constant dense<0.000000e+00> : vector<8xf32>
    %45 = vector.multi_reduction <add>, %44, %cst_13 [1] : vector<8x8xf32> to vector<8xf32>
    %46 = vector.shape_cast %45 : vector<8xf32> to vector<8x1xf32>
    %47 = tpu.reciprocal %46 {approx = true} : vector<8x1xf32> -> vector<8x1xf32>
    %48 = vector.broadcast %47 : vector<8x1xf32> to vector<8x8xf32>
    %49 = arith.mulf %44, %48 : vector<8x8xf32>
    %50 = arith.truncf %49 : vector<8x8xf32> to vector<8x8xbf16>
    %cst_14 = arith.constant dense<0.000000e+00> : vector<8x8xf32>
    %51 = tpu.matmul %50, %36, %cst_14 {dimension_numbers = #tpu.dot_dimension_numbers<[1], [0], [0], [1], [0, 0, 1, 1], [], []>} : vector<8x8xbf16>, vector<8x8xbf16>, vector<8x8xf32> -> vector<8x8xf32>
    %52 = vector.extract_strided_slice %7 {offsets = [0, 16], sizes = [8, 8], strides = [1, 1]} : vector<16x32xf32> to vector<8x8xf32>
    %53 = arith.truncf %52 : vector<8x8xf32> to vector<8x8xbf16>
    %54 = vector.extract_strided_slice %8 {offsets = [0, 16], sizes = [8, 8], strides = [1, 1]} : vector<16x32xf32> to vector<8x8xf32>
    %55 = arith.truncf %54 : vector<8x8xf32> to vector<8x8xbf16>
    %56 = vector.extract_strided_slice %9 {offsets = [0, 16], sizes = [8, 8], strides = [1, 1]} : vector<16x32xf32> to vector<8x8xf32>
    %57 = arith.truncf %56 : vector<8x8xf32> to vector<8x8xbf16>
    %cst_15 = arith.constant dense<0.000000e+00> : vector<8x8xf32>
    %58 = tpu.matmul %53, %55, %cst_15 {dimension_numbers = #tpu.dot_dimension_numbers<[1], [1], [0], [0], [0, 0, 1, 0], [], []>} : vector<8x8xbf16>, vector<8x8xbf16>, vector<8x8xf32> -> vector<8x8xf32>
    %cst_16 = arith.constant 0.353553385 : f32
    %59 = vector.broadcast %cst_16 : f32 to vector<8x8xf32>
    %60 = arith.mulf %58, %59 : vector<8x8xf32>
    %cst_17 = arith.constant dense<0xFF800000> : vector<8xf32>
    %61 = vector.multi_reduction <maximumf>, %60, %cst_17 [1] : vector<8x8xf32> to vector<8xf32>
    %62 = vector.shape_cast %61 : vector<8xf32> to vector<8x1xf32>
    %63 = vector.broadcast %62 : vector<8x1xf32> to vector<8x8xf32>
    %64 = arith.subf %60, %63 : vector<8x8xf32>
    %65 = math.exp %64 : vector<8x8xf32>
    %cst_18 = arith.constant dense<0.000000e+00> : vector<8xf32>
    %66 = vector.multi_reduction <add>, %65, %cst_18 [1] : vector<8x8xf32> to vector<8xf32>
    %67 = vector.shape_cast %66 : vector<8xf32> to vector<8x1xf32>
    %68 = tpu.reciprocal %67 {approx = true} : vector<8x1xf32> -> vector<8x1xf32>
    %69 = vector.broadcast %68 : vector<8x1xf32> to vector<8x8xf32>
    %70 = arith.mulf %65, %69 : vector<8x8xf32>
    %71 = arith.truncf %70 : vector<8x8xf32> to vector<8x8xbf16>
    %cst_19 = arith.constant dense<0.000000e+00> : vector<8x8xf32>
    %72 = tpu.matmul %71, %57, %cst_19 {dimension_numbers = #tpu.dot_dimension_numbers<[1], [0], [0], [1], [0, 0, 1, 1], [], []>} : vector<8x8xbf16>, vector<8x8xbf16>, vector<8x8xf32> -> vector<8x8xf32>
    %73 = vector.extract_strided_slice %7 {offsets = [0, 24], sizes = [8, 8], strides = [1, 1]} : vector<16x32xf32> to vector<8x8xf32>
    %74 = arith.truncf %73 : vector<8x8xf32> to vector<8x8xbf16>
    %75 = vector.extract_strided_slice %8 {offsets = [0, 24], sizes = [8, 8], strides = [1, 1]} : vector<16x32xf32> to vector<8x8xf32>
    %76 = arith.truncf %75 : vector<8x8xf32> to vector<8x8xbf16>
    %77 = vector.extract_strided_slice %9 {offsets = [0, 24], sizes = [8, 8], strides = [1, 1]} : vector<16x32xf32> to vector<8x8xf32>
    %78 = arith.truncf %77 : vector<8x8xf32> to vector<8x8xbf16>
    %cst_20 = arith.constant dense<0.000000e+00> : vector<8x8xf32>
    %79 = tpu.matmul %74, %76, %cst_20 {dimension_numbers = #tpu.dot_dimension_numbers<[1], [1], [0], [0], [0, 0, 1, 0], [], []>} : vector<8x8xbf16>, vector<8x8xbf16>, vector<8x8xf32> -> vector<8x8xf32>
    %cst_21 = arith.constant 0.353553385 : f32
    %80 = vector.broadcast %cst_21 : f32 to vector<8x8xf32>
    %81 = arith.mulf %79, %80 : vector<8x8xf32>
    %cst_22 = arith.constant dense<0xFF800000> : vector<8xf32>
    %82 = vector.multi_reduction <maximumf>, %81, %cst_22 [1] : vector<8x8xf32> to vector<8xf32>
    %83 = vector.shape_cast %82 : vector<8xf32> to vector<8x1xf32>
    %84 = vector.broadcast %83 : vector<8x1xf32> to vector<8x8xf32>
    %85 = arith.subf %81, %84 : vector<8x8xf32>
    %86 = math.exp %85 : vector<8x8xf32>
    %cst_23 = arith.constant dense<0.000000e+00> : vector<8xf32>
    %87 = vector.multi_reduction <add>, %86, %cst_23 [1] : vector<8x8xf32> to vector<8xf32>
    %88 = vector.shape_cast %87 : vector<8xf32> to vector<8x1xf32>
    %89 = tpu.reciprocal %88 {approx = true} : vector<8x1xf32> -> vector<8x1xf32>
    %90 = vector.broadcast %89 : vector<8x1xf32> to vector<8x8xf32>
    %91 = arith.mulf %86, %90 : vector<8x8xf32>
    %92 = arith.truncf %91 : vector<8x8xf32> to vector<8x8xbf16>
    %cst_24 = arith.constant dense<0.000000e+00> : vector<8x8xf32>
    %93 = tpu.matmul %92, %78, %cst_24 {dimension_numbers = #tpu.dot_dimension_numbers<[1], [0], [0], [1], [0, 0, 1, 1], [], []>} : vector<8x8xbf16>, vector<8x8xbf16>, vector<8x8xf32> -> vector<8x8xf32>
    %94 = tpu.concatenate %30, %51, %72, %93 in 1 : vector<8x8xf32>, vector<8x8xf32>, vector<8x8xf32>, vector<8x8xf32> -> vector<8x32xf32>
    %95 = vector.extract_strided_slice %7 {offsets = [8, 0], sizes = [8, 8], strides = [1, 1]} : vector<16x32xf32> to vector<8x8xf32>
    %96 = arith.truncf %95 : vector<8x8xf32> to vector<8x8xbf16>
    %97 = vector.extract_strided_slice %8 {offsets = [8, 0], sizes = [8, 8], strides = [1, 1]} : vector<16x32xf32> to vector<8x8xf32>
    %98 = arith.truncf %97 : vector<8x8xf32> to vector<8x8xbf16>
    %99 = vector.extract_strided_slice %9 {offsets = [8, 0], sizes = [8, 8], strides = [1, 1]} : vector<16x32xf32> to vector<8x8xf32>
    %100 = arith.truncf %99 : vector<8x8xf32> to vector<8x8xbf16>
    %cst_25 = arith.constant dense<0.000000e+00> : vector<8x8xf32>
    %101 = tpu.matmul %96, %98, %cst_25 {dimension_numbers = #tpu.dot_dimension_numbers<[1], [1], [0], [0], [0, 0, 1, 0], [], []>} : vector<8x8xbf16>, vector<8x8xbf16>, vector<8x8xf32> -> vector<8x8xf32>
    %cst_26 = arith.constant 0.353553385 : f32
    %102 = vector.broadcast %cst_26 : f32 to vector<8x8xf32>
    %103 = arith.mulf %101, %102 : vector<8x8xf32>
    %cst_27 = arith.constant dense<0xFF800000> : vector<8xf32>
    %104 = vector.multi_reduction <maximumf>, %103, %cst_27 [1] : vector<8x8xf32> to vector<8xf32>
    %105 = vector.shape_cast %104 : vector<8xf32> to vector<8x1xf32>
    %106 = vector.broadcast %105 : vector<8x1xf32> to vector<8x8xf32>
    %107 = arith.subf %103, %106 : vector<8x8xf32>
    %108 = math.exp %107 : vector<8x8xf32>
    %cst_28 = arith.constant dense<0.000000e+00> : vector<8xf32>
    %109 = vector.multi_reduction <add>, %108, %cst_28 [1] : vector<8x8xf32> to vector<8xf32>
    %110 = vector.shape_cast %109 : vector<8xf32> to vector<8x1xf32>
    %111 = tpu.reciprocal %110 {approx = true} : vector<8x1xf32> -> vector<8x1xf32>
    %112 = vector.broadcast %111 : vector<8x1xf32> to vector<8x8xf32>
    %113 = arith.mulf %108, %112 : vector<8x8xf32>
    %114 = arith.truncf %113 : vector<8x8xf32> to vector<8x8xbf16>
    %cst_29 = arith.constant dense<0.000000e+00> : vector<8x8xf32>
    %115 = tpu.matmul %114, %100, %cst_29 {dimension_numbers = #tpu.dot_dimension_numbers<[1], [0], [0], [1], [0, 0, 1, 1], [], []>} : vector<8x8xbf16>, vector<8x8xbf16>, vector<8x8xf32> -> vector<8x8xf32>
    %116 = vector.extract_strided_slice %7 {offsets = [8, 8], sizes = [8, 8], strides = [1, 1]} : vector<16x32xf32> to vector<8x8xf32>
    %117 = arith.truncf %116 : vector<8x8xf32> to vector<8x8xbf16>
    %118 = vector.extract_strided_slice %8 {offsets = [8, 8], sizes = [8, 8], strides = [1, 1]} : vector<16x32xf32> to vector<8x8xf32>
    %119 = arith.truncf %118 : vector<8x8xf32> to vector<8x8xbf16>
    %120 = vector.extract_strided_slice %9 {offsets = [8, 8], sizes = [8, 8], strides = [1, 1]} : vector<16x32xf32> to vector<8x8xf32>
    %121 = arith.truncf %120 : vector<8x8xf32> to vector<8x8xbf16>
    %cst_30 = arith.constant dense<0.000000e+00> : vector<8x8xf32>
    %122 = tpu.matmul %117, %119, %cst_30 {dimension_numbers = #tpu.dot_dimension_numbers<[1], [1], [0], [0], [0, 0, 1, 0], [], []>} : vector<8x8xbf16>, vector<8x8xbf16>, vector<8x8xf32> -> vector<8x8xf32>
    %cst_31 = arith.constant 0.353553385 : f32
    %123 = vector.broadcast %cst_31 : f32 to vector<8x8xf32>
    %124 = arith.mulf %122, %123 : vector<8x8xf32>
    %cst_32 = arith.constant dense<0xFF800000> : vector<8xf32>
    %125 = vector.multi_reduction <maximumf>, %124, %cst_32 [1] : vector<8x8xf32> to vector<8xf32>
    %126 = vector.shape_cast %125 : vector<8xf32> to vector<8x1xf32>
    %127 = vector.broadcast %126 : vector<8x1xf32> to vector<8x8xf32>
    %128 = arith.subf %124, %127 : vector<8x8xf32>
    %129 = math.exp %128 : vector<8x8xf32>
    %cst_33 = arith.constant dense<0.000000e+00> : vector<8xf32>
    %130 = vector.multi_reduction <add>, %129, %cst_33 [1] : vector<8x8xf32> to vector<8xf32>
    %131 = vector.shape_cast %130 : vector<8xf32> to vector<8x1xf32>
    %132 = tpu.reciprocal %131 {approx = true} : vector<8x1xf32> -> vector<8x1xf32>
    %133 = vector.broadcast %132 : vector<8x1xf32> to vector<8x8xf32>
    %134 = arith.mulf %129, %133 : vector<8x8xf32>
    %135 = arith.truncf %134 : vector<8x8xf32> to vector<8x8xbf16>
    %cst_34 = arith.constant dense<0.000000e+00> : vector<8x8xf32>
    %136 = tpu.matmul %135, %121, %cst_34 {dimension_numbers = #tpu.dot_dimension_numbers<[1], [0], [0], [1], [0, 0, 1, 1], [], []>} : vector<8x8xbf16>, vector<8x8xbf16>, vector<8x8xf32> -> vector<8x8xf32>
    %137 = vector.extract_strided_slice %7 {offsets = [8, 16], sizes = [8, 8], strides = [1, 1]} : vector<16x32xf32> to vector<8x8xf32>
    %138 = arith.truncf %137 : vector<8x8xf32> to vector<8x8xbf16>
    %139 = vector.extract_strided_slice %8 {offsets = [8, 16], sizes = [8, 8], strides = [1, 1]} : vector<16x32xf32> to vector<8x8xf32>
    %140 = arith.truncf %139 : vector<8x8xf32> to vector<8x8xbf16>
    %141 = vector.extract_strided_slice %9 {offsets = [8, 16], sizes = [8, 8], strides = [1, 1]} : vector<16x32xf32> to vector<8x8xf32>
    %142 = arith.truncf %141 : vector<8x8xf32> to vector<8x8xbf16>
    %cst_35 = arith.constant dense<0.000000e+00> : vector<8x8xf32>
    %143 = tpu.matmul %138, %140, %cst_35 {dimension_numbers = #tpu.dot_dimension_numbers<[1], [1], [0], [0], [0, 0, 1, 0], [], []>} : vector<8x8xbf16>, vector<8x8xbf16>, vector<8x8xf32> -> vector<8x8xf32>
    %cst_36 = arith.constant 0.353553385 : f32
    %144 = vector.broadcast %cst_36 : f32 to vector<8x8xf32>
    %145 = arith.mulf %143, %144 : vector<8x8xf32>
    %cst_37 = arith.constant dense<0xFF800000> : vector<8xf32>
    %146 = vector.multi_reduction <maximumf>, %145, %cst_37 [1] : vector<8x8xf32> to vector<8xf32>
    %147 = vector.shape_cast %146 : vector<8xf32> to vector<8x1xf32>
    %148 = vector.broadcast %147 : vector<8x1xf32> to vector<8x8xf32>
    %149 = arith.subf %145, %148 : vector<8x8xf32>
    %150 = math.exp %149 : vector<8x8xf32>
    %cst_38 = arith.constant dense<0.000000e+00> : vector<8xf32>
    %151 = vector.multi_reduction <add>, %150, %cst_38 [1] : vector<8x8xf32> to vector<8xf32>
    %152 = vector.shape_cast %151 : vector<8xf32> to vector<8x1xf32>
    %153 = tpu.reciprocal %152 {approx = true} : vector<8x1xf32> -> vector<8x1xf32>
    %154 = vector.broadcast %153 : vector<8x1xf32> to vector<8x8xf32>
    %155 = arith.mulf %150, %154 : vector<8x8xf32>
    %156 = arith.truncf %155 : vector<8x8xf32> to vector<8x8xbf16>
    %cst_39 = arith.constant dense<0.000000e+00> : vector<8x8xf32>
    %157 = tpu.matmul %156, %142, %cst_39 {dimension_numbers = #tpu.dot_dimension_numbers<[1], [0], [0], [1], [0, 0, 1, 1], [], []>} : vector<8x8xbf16>, vector<8x8xbf16>, vector<8x8xf32> -> vector<8x8xf32>
    %158 = vector.extract_strided_slice %7 {offsets = [8, 24], sizes = [8, 8], strides = [1, 1]} : vector<16x32xf32> to vector<8x8xf32>
    %159 = arith.truncf %158 : vector<8x8xf32> to vector<8x8xbf16>
    %160 = vector.extract_strided_slice %8 {offsets = [8, 24], sizes = [8, 8], strides = [1, 1]} : vector<16x32xf32> to vector<8x8xf32>
    %161 = arith.truncf %160 : vector<8x8xf32> to vector<8x8xbf16>
    %162 = vector.extract_strided_slice %9 {offsets = [8, 24], sizes = [8, 8], strides = [1, 1]} : vector<16x32xf32> to vector<8x8xf32>
    %163 = arith.truncf %162 : vector<8x8xf32> to vector<8x8xbf16>
    %cst_40 = arith.constant dense<0.000000e+00> : vector<8x8xf32>
    %164 = tpu.matmul %159, %161, %cst_40 {dimension_numbers = #tpu.dot_dimension_numbers<[1], [1], [0], [0], [0, 0, 1, 0], [], []>} : vector<8x8xbf16>, vector<8x8xbf16>, vector<8x8xf32> -> vector<8x8xf32>
    %cst_41 = arith.constant 0.353553385 : f32
    %165 = vector.broadcast %cst_41 : f32 to vector<8x8xf32>
    %166 = arith.mulf %164, %165 : vector<8x8xf32>
    %cst_42 = arith.constant dense<0xFF800000> : vector<8xf32>
    %167 = vector.multi_reduction <maximumf>, %166, %cst_42 [1] : vector<8x8xf32> to vector<8xf32>
    %168 = vector.shape_cast %167 : vector<8xf32> to vector<8x1xf32>
    %169 = vector.broadcast %168 : vector<8x1xf32> to vector<8x8xf32>
    %170 = arith.subf %166, %169 : vector<8x8xf32>
    %171 = math.exp %170 : vector<8x8xf32>
    %cst_43 = arith.constant dense<0.000000e+00> : vector<8xf32>
    %172 = vector.multi_reduction <add>, %171, %cst_43 [1] : vector<8x8xf32> to vector<8xf32>
    %173 = vector.shape_cast %172 : vector<8xf32> to vector<8x1xf32>
    %174 = tpu.reciprocal %173 {approx = true} : vector<8x1xf32> -> vector<8x1xf32>
    %175 = vector.broadcast %174 : vector<8x1xf32> to vector<8x8xf32>
    %176 = arith.mulf %171, %175 : vector<8x8xf32>
    %177 = arith.truncf %176 : vector<8x8xf32> to vector<8x8xbf16>
    %cst_44 = arith.constant dense<0.000000e+00> : vector<8x8xf32>
    %178 = tpu.matmul %177, %163, %cst_44 {dimension_numbers = #tpu.dot_dimension_numbers<[1], [0], [0], [1], [0, 0, 1, 1], [], []>} : vector<8x8xbf16>, vector<8x8xbf16>, vector<8x8xf32> -> vector<8x8xf32>
    %179 = tpu.concatenate %115, %136, %157, %178 in 1 : vector<8x8xf32>, vector<8x8xf32>, vector<8x8xf32>, vector<8x8xf32> -> vector<8x32xf32>
    %180 = tpu.concatenate %94, %179 in 0 : vector<8x32xf32>, vector<8x32xf32> -> vector<16x32xf32>
    %181 = arith.truncf %180 : vector<16x32xf32> to vector<16x32xbf16>
    %c0_45 = arith.constant 0 : index
    %c0_46 = arith.constant 0 : index
    %182 = vector.load %arg4[%c0_45, %c0_46] : memref<32x32xbf16, #tpu.memory_space<vmem>>, vector<32x32xbf16>
    %cst_47 = arith.constant dense<0.000000e+00> : vector<16x32xf32>
    %183 = tpu.matmul %181, %182, %cst_47 {dimension_numbers = #tpu.dot_dimension_numbers<[1], [0], [0], [1], [0, 0, 1, 1], [], []>} : vector<16x32xbf16>, vector<32x32xbf16>, vector<16x32xf32> -> vector<16x32xf32>
    %c0_48 = arith.constant 0 : index
    %c0_49 = arith.constant 0 : index
    %184 = vector.load %arg5[%c0_48, %c0_49] : memref<1x32xf32, #tpu.memory_space<vmem>>, vector<1x32xf32>
    %185 = vector.broadcast %184 : vector<1x32xf32> to vector<16x32xf32>
    %186 = arith.addf %183, %185 : vector<16x32xf32>
    %187 = arith.addf %0, %186 : vector<16x32xf32>
    %c0_50 = arith.constant 0 : index
    %c0_51 = arith.constant 0 : index
    %188 = vector.load %arg6[%c0_50, %c0_51] : memref<1x32xf32, #tpu.memory_space<vmem>>, vector<1x32xf32>
    %c0_52 = arith.constant 0 : index
    %c0_53 = arith.constant 0 : index
    %189 = vector.load %arg7[%c0_52, %c0_53] : memref<1x32xf32, #tpu.memory_space<vmem>>, vector<1x32xf32>
    %cst_54 = arith.constant dense<0.000000e+00> : vector<16xf32>
    %190 = vector.multi_reduction <add>, %187, %cst_54 [1] : vector<16x32xf32> to vector<16xf32>
    %191 = vector.shape_cast %190 : vector<16xf32> to vector<16x1xf32>
    %cst_55 = arith.constant 3.200000e+01 : f32
    %192 = vector.broadcast %cst_55 : f32 to vector<16x1xf32>
    %193 = arith.divf %191, %192 : vector<16x1xf32>
    %194 = vector.broadcast %193 : vector<16x1xf32> to vector<16x32xf32>
    %195 = arith.subf %187, %194 : vector<16x32xf32>
    %196 = arith.mulf %195, %195 : vector<16x32xf32>
    %cst_56 = arith.constant dense<0.000000e+00> : vector<16xf32>
    %197 = vector.multi_reduction <add>, %196, %cst_56 [1] : vector<16x32xf32> to vector<16xf32>
    %198 = vector.shape_cast %197 : vector<16xf32> to vector<16x1xf32>
    %cst_57 = arith.constant 3.200000e+01 : f32
    %199 = vector.broadcast %cst_57 : f32 to vector<16x1xf32>
    %200 = arith.divf %198, %199 : vector<16x1xf32>
    %201 = vector.broadcast %193 : vector<16x1xf32> to vector<16x32xf32>
    %202 = arith.subf %187, %201 : vector<16x32xf32>
    %cst_58 = arith.constant 9.99999974E-6 : f32
    %203 = vector.broadcast %cst_58 : f32 to vector<16x1xf32>
    %204 = arith.addf %200, %203 : vector<16x1xf32>
    %205 = math.rsqrt %204 : vector<16x1xf32>
    %206 = vector.broadcast %205 : vector<16x1xf32> to vector<16x32xf32>
    %207 = arith.mulf %202, %206 : vector<16x32xf32>
    %208 = vector.broadcast %188 : vector<1x32xf32> to vector<16x32xf32>
    %209 = arith.mulf %207, %208 : vector<16x32xf32>
    %210 = vector.broadcast %189 : vector<1x32xf32> to vector<16x32xf32>
    %211 = arith.addf %209, %210 : vector<16x32xf32>
    %212 = arith.truncf %211 : vector<16x32xf32> to vector<16x32xbf16>
    %c0_59 = arith.constant 0 : index
    %c0_60 = arith.constant 0 : index
    %213 = vector.load %arg8[%c0_59, %c0_60] : memref<32x64xbf16, #tpu.memory_space<vmem>>, vector<32x64xbf16>
    %cst_61 = arith.constant dense<0.000000e+00> : vector<16x64xf32>
    %214 = tpu.matmul %212, %213, %cst_61 {dimension_numbers = #tpu.dot_dimension_numbers<[1], [0], [0], [1], [0, 0, 1, 1], [], []>} : vector<16x32xbf16>, vector<32x64xbf16>, vector<16x64xf32> -> vector<16x64xf32>
    %c0_62 = arith.constant 0 : index
    %c0_63 = arith.constant 0 : index
    %215 = vector.load %arg9[%c0_62, %c0_63] : memref<1x64xf32, #tpu.memory_space<vmem>>, vector<1x64xf32>
    %216 = vector.broadcast %215 : vector<1x64xf32> to vector<16x64xf32>
    %217 = arith.addf %214, %216 : vector<16x64xf32>
    %cst_64 = arith.constant 0.000000e+00 : f32
    %218 = vector.broadcast %cst_64 : f32 to vector<16x64xf32>
    %219 = arith.maximumf %217, %218 : vector<16x64xf32>
    %220 = arith.truncf %219 : vector<16x64xf32> to vector<16x64xbf16>
    %c0_65 = arith.constant 0 : index
    %c0_66 = arith.constant 0 : index
    %221 = vector.load %arg10[%c0_65, %c0_66] : memref<64x32xbf16, #tpu.memory_space<vmem>>, vector<64x32xbf16>
    %cst_67 = arith.constant dense<0.000000e+00> : vector<16x32xf32>
    %222 = tpu.matmul %220, %221, %cst_67 {dimension_numbers = #tpu.dot_dimension_numbers<[1], [0], [0], [1], [0, 0, 1, 1], [], []>} : vector<16x64xbf16>, vector<64x32xbf16>, vector<16x32xf32> -> vector<16x32xf32>
    %c0_68 = arith.constant 0 : index
    %c0_69 = arith.constant 0 : index
    %223 = vector.load %arg11[%c0_68, %c0_69] : memref<1x32xf32, #tpu.memory_space<vmem>>, vector<1x32xf32>
    %224 = vector.broadcast %223 : vector<1x32xf32> to vector<16x32xf32>
    %225 = arith.addf %222, %224 : vector<16x32xf32>
    %226 = arith.addf %211, %225 : vector<16x32xf32>
    %c0_70 = arith.constant 0 : index
    %c0_71 = arith.constant 0 : index
    %227 = vector.load %arg12[%c0_70, %c0_71] : memref<1x32xf32, #tpu.memory_space<vmem>>, vector<1x32xf32>
    %c0_72 = arith.constant 0 : index
    %c0_73 = arith.constant 0 : index
    %228 = vector.load %arg13[%c0_72, %c0_73] : memref<1x32xf32, #tpu.memory_space<vmem>>, vector<1x32xf32>
    %cst_74 = arith.constant dense<0.000000e+00> : vector<16xf32>
    %229 = vector.multi_reduction <add>, %226, %cst_74 [1] : vector<16x32xf32> to vector<16xf32>
    %230 = vector.shape_cast %229 : vector<16xf32> to vector<16x1xf32>
    %cst_75 = arith.constant 3.200000e+01 : f32
    %231 = vector.broadcast %cst_75 : f32 to vector<16x1xf32>
    %232 = arith.divf %230, %231 : vector<16x1xf32>
    %233 = vector.broadcast %232 : vector<16x1xf32> to vector<16x32xf32>
    %234 = arith.subf %226, %233 : vector<16x32xf32>
    %235 = arith.mulf %234, %234 : vector<16x32xf32>
    %cst_76 = arith.constant dense<0.000000e+00> : vector<16xf32>
    %236 = vector.multi_reduction <add>, %235, %cst_76 [1] : vector<16x32xf32> to vector<16xf32>
    %237 = vector.shape_cast %236 : vector<16xf32> to vector<16x1xf32>
    %cst_77 = arith.constant 3.200000e+01 : f32
    %238 = vector.broadcast %cst_77 : f32 to vector<16x1xf32>
    %239 = arith.divf %237, %238 : vector<16x1xf32>
    %240 = vector.broadcast %232 : vector<16x1xf32> to vector<16x32xf32>
    %241 = arith.subf %226, %240 : vector<16x32xf32>
    %cst_78 = arith.constant 9.99999974E-6 : f32
    %242 = vector.broadcast %cst_78 : f32 to vector<16x1xf32>
    %243 = arith.addf %239, %242 : vector<16x1xf32>
    %244 = math.rsqrt %243 : vector<16x1xf32>
    %245 = vector.broadcast %244 : vector<16x1xf32> to vector<16x32xf32>
    %246 = arith.mulf %241, %245 : vector<16x32xf32>
    %247 = vector.broadcast %227 : vector<1x32xf32> to vector<16x32xf32>
    %248 = arith.mulf %246, %247 : vector<16x32xf32>
    %249 = vector.broadcast %228 : vector<1x32xf32> to vector<16x32xf32>
    %250 = arith.addf %248, %249 : vector<16x32xf32>
    %c0_79 = arith.constant 0 : index
    %c0_80 = arith.constant 0 : index
    %251 = vector.load %arg14[%c0_79, %c0_80] : memref<16x32xf32, #tpu.memory_space<vmem>>, vector<16x32xf32>
    tpu.vector_store %arg14[%c0_79, %c0_80], %250 {strides = array<i32>} : memref<16x32xf32, #tpu.memory_space<vmem>>, vector<16x32xf32>,
    return
  }
  func.func @transform_0(%arg0: i32) -> (i32, i32) {
    %c0_i32 = arith.constant 0 : i32
    %c0_i32_0 = arith.constant 0 : i32
    %c0_i32_1 = arith.constant 0 : i32
    return %c0_i32, %c0_i32_0 : i32, i32
  }
  func.func @transform_1(%arg0: i32) -> (i32, i32) {
    %c0_i32 = arith.constant 0 : i32
    %c0_i32_0 = arith.constant 0 : i32
    %c0_i32_1 = arith.constant 0 : i32
    return %c0_i32, %c0_i32_0 : i32, i32
  }
  func.func @transform_2(%arg0: i32) -> (i32, i32) {
    %c0_i32 = arith.constant 0 : i32
    %c0_i32_0 = arith.constant 0 : i32
    %c0_i32_1 = arith.constant 0 : i32
    return %c0_i32, %c0_i32_0 : i32, i32
  }
  func.func @transform_3(%arg0: i32) -> (i32, i32) {
    %c0_i32 = arith.constant 0 : i32
    %c0_i32_0 = arith.constant 0 : i32
    %c0_i32_1 = arith.constant 0 : i32
    return %c0_i32, %c0_i32_0 : i32, i32
  }
  func.func @transform_4(%arg0: i32) -> (i32, i32) {
    %c0_i32 = arith.constant 0 : i32
    %c0_i32_0 = arith.constant 0 : i32
    %c0_i32_1 = arith.constant 0 : i32
    return %c0_i32, %c0_i32_0 : i32, i32
  }
  func.func @transform_5(%arg0: i32) -> (i32, i32) {
    %c0_i32 = arith.constant 0 : i32
    %c0_i32_0 = arith.constant 0 : i32
    %c0_i32_1 = arith.constant 0 : i32
    return %c0_i32, %c0_i32_0 : i32, i32
  }
  func.func @transform_6(%arg0: i32) -> (i32, i32) {
    %c0_i32 = arith.constant 0 : i32
    %c0_i32_0 = arith.constant 0 : i32
    %c0_i32_1 = arith.constant 0 : i32
    return %c0_i32, %c0_i32_0 : i32, i32
  }
  func.func @transform_7(%arg0: i32) -> (i32, i32) {
    %c0_i32 = arith.constant 0 : i32
    %c0_i32_0 = arith.constant 0 : i32
    %c0_i32_1 = arith.constant 0 : i32
    return %c0_i32, %c0_i32_0 : i32, i32
  }
  func.func @transform_8(%arg0: i32) -> (i32, i32) {
    %c0_i32 = arith.constant 0 : i32
    %c0_i32_0 = arith.constant 0 : i32
    %c0_i32_1 = arith.constant 0 : i32
    return %c0_i32, %c0_i32_0 : i32, i32
  }
  func.func @transform_9(%arg0: i32) -> (i32, i32) {
    %c0_i32 = arith.constant 0 : i32
    %c0_i32_0 = arith.constant 0 : i32
    %c0_i32_1 = arith.constant 0 : i32
    return %c0_i32, %c0_i32_0 : i32, i32
  }
  func.func @transform_10(%arg0: i32) -> (i32, i32) {
    %c0_i32 = arith.constant 0 : i32
    %c0_i32_0 = arith.constant 0 : i32
    %c0_i32_1 = arith.constant 0 : i32
    return %c0_i32, %c0_i32_0 : i32, i32
  }
  func.func @transform_11(%arg0: i32) -> (i32, i32) {
    %c0_i32 = arith.constant 0 : i32
    %c0_i32_0 = arith.constant 0 : i32
    %c0_i32_1 = arith.constant 0 : i32
    return %c0_i32, %c0_i32_0 : i32, i32
  }
  func.func @transform_12(%arg0: i32) -> (i32, i32) {
    %c0_i32 = arith.constant 0 : i32
    %c0_i32_0 = arith.constant 0 : i32
    %c0_i32_1 = arith.constant 0 : i32
    return %c0_i32, %c0_i32_0 : i32, i32
  }
  func.func @transform_13(%arg0: i32) -> (i32, i32) {
    %c0_i32 = arith.constant 0 : i32
    %c0_i32_0 = arith.constant 0 : i32
    %c0_i32_1 = arith.constant 0 : i32
    return %c0_i32, %c0_i32_0 : i32, i32
  }
}

</mosaic_0001>

<llo_original>
// kernel: tpu_custom_call.1
$region0: #{tpu_custom_call.1}
  #allocation0 [shape = 'u32[]', space=smem, size = 0x4, offset = 0x4, fixed_abs, tag = 'smem constant byte address 0x4 - core index']
  #allocation1 [shape = 'u32[144,128]{1,0:T(1,128)}', space=vmem, size = 0x12000, scoped, tag = 'internal scratch']
  %s0 = inlined_call_operand.vmem [shape: f32[16,32], index: 0, kind: input, shape index: {}]
  %s1 = inlined_call_operand.vmem [shape: bf16[32,96], index: 1, kind: input, shape index: {}]
  %s2 = inlined_call_operand.vmem [shape: f32[1,96], index: 2, kind: input, shape index: {}]
  %s3 = inlined_call_operand.vmem [shape: bf16[32,32], index: 3, kind: input, shape index: {}]
  %s4 = inlined_call_operand.vmem [shape: f32[1,32], index: 4, kind: input, shape index: {}]
  %s5 = inlined_call_operand.vmem [shape: f32[1,32], index: 5, kind: input, shape index: {}]
  %s6 = inlined_call_operand.vmem [shape: f32[1,32], index: 6, kind: input, shape index: {}]
  %s7 = inlined_call_operand.hbm [shape: bf16[32,64], index: 7, kind: input, shape index: {}]
  %s8 = inlined_call_operand.vmem [shape: f32[1,64], index: 8, kind: input, shape index: {}]
  %s9 = inlined_call_operand.vmem [shape: bf16[64,32], index: 9, kind: input, shape index: {}]
  %s10 = inlined_call_operand.vmem [shape: f32[1,32], index: 10, kind: input, shape index: {}]
  %s11 = inlined_call_operand.vmem [shape: f32[1,32], index: 11, kind: input, shape index: {}]
  %s12 = inlined_call_operand.vmem [shape: f32[1,32], index: 12, kind: input, shape index: {}]
  %s13 = inlined_call_operand.hbm [shape: f32[16,32], index: 13, kind: output, shape index: {}]
  %s14 = sld [smem:[#allocation0]]
  $region66: #{tpu_custom_call.1} parent=0
    _
  %s16 = ssub.s32 1, %s14
  %s17 = scalar_select 0, %s16, %s14
  $region1: #{tpu_custom_call.1} parent=0
    #allocation2 [shape = 'u8[8192]{0}', space=vmem, size = 0x2000, scoped, tag = 'input window, operand 7, single buffered']
    #allocation3 [shape = 's32[1]{0}', space=sflag, size = 0x4, scoped, tag = 'scoped memory for tpu_custom_call.1']
    #allocation4 [shape = 's32[1]{0}', space=sflag, size = 0x4, scoped, tag = 'scoped memory for tpu_custom_call.1']
    #allocation5 [shape = 'u8[8192]{0}', space=vmem, size = 0x2000, scoped, tag = 'output window, operand 0, single buffered']
    %18 = vsyncpa [#allocation3], 0
    %19 = vsyncpa [#allocation4], 0
    // Predicated region
    $region2: #{tpu_custom_call.1} parent=1 // pred_check
      _
    $region3: #{tpu_custom_call.1} parent=1 // pred_check_branch
      %21 = sbr.rel (0) target = $region5
    $region4: #{tpu_custom_call.1} parent=1 // pred_region
      _
    $region5: #{tpu_custom_call.1} parent=1 // pred_fallthru
      _
    // Predicated region
    $region6: #{tpu_custom_call.1} parent=1 // pred_check
      _
    $region7: #{tpu_custom_call.1} parent=1 // pred_check_branch
      %23 = sbr.rel (0) target = $region9
    $region8: #{tpu_custom_call.1} parent=1 // pred_region
      _
    $region9: #{tpu_custom_call.1} parent=1 // pred_fallthru
      _
    // Predicated region
    $region10: #{tpu_custom_call.1} parent=1 // pred_check
      _
    $region11: #{tpu_custom_call.1} parent=1 // pred_check_branch
      %25 = sbr.rel (0) target = $region13
    $region12: #{tpu_custom_call.1} parent=1 // pred_region
      _
    $region13: #{tpu_custom_call.1} parent=1 // pred_fallthru
      _
    // Predicated region
    $region14: #{tpu_custom_call.1} parent=1 // pred_check
      _
    $region15: #{tpu_custom_call.1} parent=1 // pred_check_branch
      %27 = sbr.rel (0) target = $region17
    $region16: #{tpu_custom_call.1} parent=1 // pred_region
      _
    $region17: #{tpu_custom_call.1} parent=1 // pred_fallthru
      _
    // Predicated region
    $region18: #{tpu_custom_call.1} parent=1 // pred_check
      _
    $region19: #{tpu_custom_call.1} parent=1 // pred_check_branch
      %29 = sbr.rel (0) target = $region21
    $region20: #{tpu_custom_call.1} parent=1 // pred_region
      _
    $region21: #{tpu_custom_call.1} parent=1 // pred_fallthru
      _
    // Predicated region
    $region22: #{tpu_custom_call.1} parent=1 // pred_check
      _
    $region23: #{tpu_custom_call.1} parent=1 // pred_check_branch
      %31 = sbr.rel (0) target = $region25
    $region24: #{tpu_custom_call.1} parent=1 // pred_region
      _
    $region25: #{tpu_custom_call.1} parent=1 // pred_fallthru
      _
    // Predicated region
    $region26: #{tpu_custom_call.1} parent=1 // pred_check
      _
    $region27: #{tpu_custom_call.1} parent=1 // pred_check_branch
      %33 = sbr.rel (0) target = $region29
    $region28: #{tpu_custom_call.1} parent=1 // pred_region
      _
    $region29: #{tpu_custom_call.1} parent=1 // pred_fallthru
      _
    // Predicated region
    $region30: #{tpu_custom_call.1} parent=1 // pred_check
      _
    $region31: #{tpu_custom_call.1} parent=1 // pred_check_branch
      %35 = sbr.rel (0) target = $region33
    $region32: #{tpu_custom_call.1} parent=1 // pred_region
      %s37 = ssub.s32 256, 256
      %38 = vsyncadd [#allocation3], %s37
      %s39 = sshll.u32 [#allocation2], 4
      %s40 = int_to_ptr.vmem [resolvable:$true] %s39
      %45 = dma.hbm_to_vmem [thread:$0]  %s7, 256, %s40, [#allocation3], 64, 64, 4
    $region33: #{tpu_custom_call.1} parent=1 // pred_fallthru
      _
    // Predicated region
    $region34: #{tpu_custom_call.1} parent=1 // pred_check
      _
    $region35: #{tpu_custom_call.1} parent=1 // pred_check_branch
      %47 = sbr.rel (0) target = $region37
    $region36: #{tpu_custom_call.1} parent=1 // pred_region
      _
    $region37: #{tpu_custom_call.1} parent=1 // pred_fallthru
      _
    // Predicated region
    $region38: #{tpu_custom_call.1} parent=1 // pred_check
      _
    $region39: #{tpu_custom_call.1} parent=1 // pred_check_branch
      %49 = sbr.rel (0) target = $region41
    $region40: #{tpu_custom_call.1} parent=1 // pred_region
      _
    $region41: #{tpu_custom_call.1} parent=1 // pred_fallthru
      _
    // Predicated region
    $region42: #{tpu_custom_call.1} parent=1 // pred_check
      _
    $region43: #{tpu_custom_call.1} parent=1 // pred_check_branch
      %51 = sbr.rel (0) target = $region45
    $region44: #{tpu_custom_call.1} parent=1 // pred_region
      _
    $region45: #{tpu_custom_call.1} parent=1 // pred_fallthru
      _
    // Predicated region
    $region46: #{tpu_custom_call.1} parent=1 // pred_check
      _
    $region47: #{tpu_custom_call.1} parent=1 // pred_check_branch
      %53 = sbr.rel (0) target = $region49
    $region48: #{tpu_custom_call.1} parent=1 // pred_region
      _
    $region49: #{tpu_custom_call.1} parent=1 // pred_fallthru
      _
    // Predicated region
    $region50: #{tpu_custom_call.1} parent=1 // pred_check
      _
    $region51: #{tpu_custom_call.1} parent=1 // pred_check_branch
      %55 = sbr.rel (0) target = $region53
    $region52: #{tpu_custom_call.1} parent=1 // pred_region
      _
    $region53: #{tpu_custom_call.1} parent=1 // pred_fallthru
      _
    // Predicated region
    $region54: #{tpu_custom_call.1} parent=1 // pred_check
      _
    $region55: #{tpu_custom_call.1} parent=1 // pred_check_branch
      %57 = sbr.rel (0) target = $region57
    $region56: #{tpu_custom_call.1} parent=1 // pred_region
      %58 = dma.done [#allocation3], 256
    $region57: #{tpu_custom_call.1} parent=1 // pred_fallthru
      _
    %v60 = vld [vmem:[%s0] sm:$0xff]
    %v61 = vld [vmem:[%s0 + $0x8] sm:$0xff]
    %v62 = vpack.c.bf16 %v61, %v60
    %v63 = vld [vmem:[%s1] sm:$0xf]
    %v64 = vld [vmem:[%s1 + $0x4] sm:$0xf]
    %v65 = vld [vmem:[%s1 + $0x8] sm:$0xf]
    %v66 = vld [vmem:[%s1 + $0xc] sm:$0xf]
    %v67 = vld [vmem:[%s2] sm:$0x1]
    %v69 = vlaneseq
    %v70 = vshrl.u32 %v69, 7
    %v71 = vsub.s32 0, %v70
    %v72 = vrot.slane %v67, %v71
    %v78 = vunpack.c.l.b16 %v63
    %v79 = vunpack.c.l.b16 %v64
    %v80 = vunpack.c.l.b16 %v65
    %v81 = vunpack.c.l.b16 %v66
    %v82 = vpack.c.b16 %v79, %v78
    %v83 = vpack.c.b16 %v81, %v80
    %vm86 = vcmask 261120
    %v88 = vsel %vm86, %v62, 0
    %90 = vmatprep.subr.bf16.mxu0 0
    %91 = vmatpush1.bf16.msra.mxu0 %v82
    %92 = vmatprep.subr.bf16.mxu0 0
    %93 = vmatpush1.bf16.msra.mxu0 %v83
    %94 = vmatprep.subr.bf16.mxu0 0
    %95 = vmatpush1.bf16.msra.mxu0 0
    %96 = vmatprep.subr.bf16.mxu0 0
    %97 = vmatpush1.bf16.msra.mxu0 0
    %98 = vmatprep.subr.bf16.mxu0 0
    %99 = vmatpush1.bf16.msra.mxu0 0
    %100 = vmatprep.subr.bf16.mxu0 0
    %101 = vmatpush1.bf16.msra.mxu0 0
    %102 = vmatprep.subr.bf16.mxu0 0
    %103 = vmatpush1.bf16.msra.mxu0 0
    %104 = vmatprep.subr.bf16.mxu0 0
    %105 = vmatpush1.bf16.msra.mxu0 0
    %106 = vmatprep.subr.bf16.mxu0 0
    %107 = vmatpush1.bf16.msra.mxu0 0
    %108 = vmatprep.subr.bf16.mxu0 0
    %109 = vmatpush1.bf16.msra.mxu0 0
    %110 = vmatprep.subr.bf16.mxu0 0
    %111 = vmatpush1.bf16.msra.mxu0 0
    %112 = vmatprep.subr.bf16.mxu0 0
    %113 = vmatpush1.bf16.msra.mxu0 0
    %114 = vmatprep.subr.bf16.mxu0 0
    %115 = vmatpush1.bf16.msra.mxu0 0
    %116 = vmatprep.subr.bf16.mxu0 0
    %117 = vmatpush1.bf16.msra.mxu0 0
    %118 = vmatprep.subr.bf16.mxu0 0
    %119 = vmatpush1.bf16.msra.mxu0 0
    %120 = vmatprep.subr.bf16.mxu0 0
    %121 = vmatpush1.bf16.msra.mxu0 0
    %122 = vmatprep.mubr.bf16.mxu0 0
    %123 = vmatmul.mubr.bf16.gmra.mrb[0].mxu0 %v88
    %v124 = vpop.f32.mrb[0].mxu0
    %v125 = vadd.f32 %v72, %v124
    %v126 = vpop.f32.mrb[0].mxu0
    %v127 = vpop.f32.mrb[0].mxu0
    %v128 = vadd.f32 %v72, %v127
    %v129 = vpop.f32.mrb[0].mxu0
    %130 = vdwg.mxu0
    %v131 = vpack.c.bf16 %v125, %v125
    %133 = vrot.lane.b32.xlu0 %v131, 96
    %v134 = vpop.permute.xlu0 %133
    %vm135 = vcmask 64512
    %v137 = vsel %vm135, %v131, 0
    %v140 = vsel %vm135, %v134, 0
    %142 = vmatprep.subr.bf16.mxu0 0
    %143 = vmatpush1.bf16.xpose.msra.mxu0 %v140
    %144 = vmatprep.subr.bf16.mxu0 0
    %145 = vmatpush1.bf16.xpose.msra.mxu0 0
    %146 = vmatprep.subr.bf16.mxu0 0
    %147 = vmatpush1.bf16.xpose.msra.mxu0 0
    %148 = vmatprep.subr.bf16.mxu0 0
    %149 = vmatpush1.bf16.xpose.msra.mxu0 0
    %150 = vmatprep.subr.bf16.mxu0 0
    %151 = vmatpush1.bf16.xpose.msra.mxu0 0
    %152 = vmatprep.subr.bf16.mxu0 0
    %153 = vmatpush1.bf16.xpose.msra.mxu0 0
    %154 = vmatprep.subr.bf16.mxu0 0
    %155 = vmatpush1.bf16.xpose.msra.mxu0 0
    %156 = vmatprep.subr.bf16.mxu0 0
    %157 = vmatpush1.bf16.xpose.msra.mxu0 0
    %158 = vmatprep.subr.bf16.mxu0 0
    %159 = vmatpush1.bf16.xpose.msra.mxu0 0
    %160 = vmatprep.subr.bf16.mxu0 0
    %161 = vmatpush1.bf16.xpose.msra.mxu0 0
    %162 = vmatprep.subr.bf16.mxu0 0
    %163 = vmatpush1.bf16.xpose.msra.mxu0 0
    %164 = vmatprep.subr.bf16.mxu0 0
    %165 = vmatpush1.bf16.xpose.msra.mxu0 0
    %166 = vmatprep.subr.bf16.mxu0 0
    %167 = vmatpush1.bf16.xpose.msra.mxu0 0
    %168 = vmatprep.subr.bf16.mxu0 0
    %169 = vmatpush1.bf16.xpose.msra.mxu0 0
    %170 = vmatprep.subr.bf16.mxu0 0
    %171 = vmatpush1.bf16.xpose.msra.mxu0 0
    %172 = vmatprep.subr.bf16.mxu0 0
    %173 = vmatpush1.bf16.xpose.msra.mxu0 0
    %174 = vmatprep.mubr.bf16.mxu0 0
    %175 = vmatmul.mubr.bf16.gmra.mrb[0].mxu0 %v137
    %v176 = vpop.f32.mrb[0].mxu0
    %v177 = vadd.f32 0.0, %v176
    %v178 = vpop.f32.mrb[0].mxu0
    %v179 = vpop.f32.mrb[0].mxu0
    %v180 = vpop.f32.mrb[0].mxu0
    %181 = vdwg.mxu0
    %v182 = vmul.f32 %v177, 0.35355338
    %v183 = vsel %vm135, %v182, -inf
    %184 = vmax.xlane.f32.xlu0 %v183
    %v185 = vpop.xlane.xlu0 %184
    %v186 = vsub.f32 %v182, %v185
    %v187 = vmul.f32 %v186, 1.442695
    %v188 = vpow.pop %v187
    %v189 = vsel %vm135, %v188, 0.0
    %190 = vadd.xlane.f32.xlu0 %v189
    %v191 = vpop.xlane.xlu0 %190
    %v192 = vrcp.pop %v191
    %v193 = vmul.f32 %v188, %v192
    %v194 = vpack.c.bf16 %v193, %v193
    %195 = vrot.lane.b32.xlu0 %v131, 64
    %v196 = vpop.permute.xlu0 %195
    %v198 = vsel %vm135, %v194, 0
    %vm200 = vcmask 1043456
    %v202 = vsel %vm200, %v196, 0
    %204 = vmatprep.subr.bf16.mxu0 0
    %205 = vmatpush1.bf16.msra.mxu0 %v202
    %206 = vmatprep.subr.bf16.mxu0 0
    %207 = vmatpush1.bf16.msra.mxu0 0
    %208 = vmatprep.subr.bf16.mxu0 0
    %209 = vmatpush1.bf16.msra.mxu0 0
    %210 = vmatprep.subr.bf16.mxu0 0
    %211 = vmatpush1.bf16.msra.mxu0 0
    %212 = vmatprep.subr.bf16.mxu0 0
    %213 = vmatpush1.bf16.msra.mxu0 0
    %214 = vmatprep.subr.bf16.mxu0 0
    %215 = vmatpush1.bf16.msra.mxu0 0
    %216 = vmatprep.subr.bf16.mxu0 0
    %217 = vmatpush1.bf16.msra.mxu0 0
    %218 = vmatprep.subr.bf16.mxu0 0
    %219 = vmatpush1.bf16.msra.mxu0 0
    %220 = vmatprep.subr.bf16.mxu0 0
    %221 = vmatpush1.bf16.msra.mxu0 0
    %222 = vmatprep.subr.bf16.mxu0 0
    %223 = vmatpush1.bf16.msra.mxu0 0
    %224 = vmatprep.subr.bf16.mxu0 0
    %225 = vmatpush1.bf16.msra.mxu0 0
    %226 = vmatprep.subr.bf16.mxu0 0
    %227 = vmatpush1.bf16.msra.mxu0 0
    %228 = vmatprep.subr.bf16.mxu0 0
    %229 = vmatpush1.bf16.msra.mxu0 0
    %230 = vmatprep.subr.bf16.mxu0 0
    %231 = vmatpush1.bf16.msra.mxu0 0
    %232 = vmatprep.subr.bf16.mxu0 0
    %233 = vmatpush1.bf16.msra.mxu0 0
    %234 = vmatprep.subr.bf16.mxu0 0
    %235 = vmatpush1.bf16.msra.mxu0 0
    %236 = vmatprep.mubr.bf16.mxu0 0
    %237 = vmatmul.mubr.bf16.gmra.mrb[0].mxu0 %v198
    %v238 = vpop.f32.mrb[0].mxu0
    %v239 = vadd.f32 0.0, %v238
    %v240 = vpop.f32.mrb[0].mxu0
    %v241 = vpop.f32.mrb[0].mxu0
    %v242 = vpop.f32.mrb[0].mxu0
    %243 = vdwg.mxu0
    %244 = vrot.lane.b32.xlu0 %v131, 120
    %v245 = vpop.permute.xlu0 %244
    %246 = vrot.lane.b32.xlu0 %v131, 88
    %v247 = vpop.permute.xlu0 %246
    %v249 = vsel %vm135, %v245, 0
    %v252 = vsel %vm135, %v247, 0
    %254 = vmatprep.subr.bf16.mxu0 0
    %255 = vmatpush1.bf16.xpose.msra.mxu0 %v252
    %256 = vmatprep.subr.bf16.mxu0 0
    %257 = vmatpush1.bf16.xpose.msra.mxu0 0
    %258 = vmatprep.subr.bf16.mxu0 0
    %259 = vmatpush1.bf16.xpose.msra.mxu0 0
    %260 = vmatprep.subr.bf16.mxu0 0
    %261 = vmatpush1.bf16.xpose.msra.mxu0 0
    %262 = vmatprep.subr.bf16.mxu0 0
    %263 = vmatpush1.bf16.xpose.msra.mxu0 0
    %264 = vmatprep.subr.bf16.mxu0 0
    %265 = vmatpush1.bf16.xpose.msra.mxu0 0
    %266 = vmatprep.subr.bf16.mxu0 0
    %267 = vmatpush1.bf16.xpose.msra.mxu0 0
    %268 = vmatprep.subr.bf16.mxu0 0
    %269 = vmatpush1.bf16.xpose.msra.mxu0 0
    %270 = vmatprep.subr.bf16.mxu0 0
    %271 = vmatpush1.bf16.xpose.msra.mxu0 0
    %272 = vmatprep.subr.bf16.mxu0 0
    %273 = vmatpush1.bf16.xpose.msra.mxu0 0
    %274 = vmatprep.subr.bf16.mxu0 0
    %275 = vmatpush1.bf16.xpose.msra.mxu0 0
    %276 = vmatprep.subr.bf16.mxu0 0
    %277 = vmatpush1.bf16.xpose.msra.mxu0 0
    %278 = vmatprep.subr.bf16.mxu0 0
    %279 = vmatpush1.bf16.xpose.msra.mxu0 0
    %280 = vmatprep.subr.bf16.mxu0 0
    %281 = vmatpush1.bf16.xpose.msra.mxu0 0
    %282 = vmatprep.subr.bf16.mxu0 0
    %283 = vmatpush1.bf16.xpose.msra.mxu0 0
    %284 = vmatprep.subr.bf16.mxu0 0
    %285 = vmatpush1.bf16.xpose.msra.mxu0 0
    %286 = vmatprep.mubr.bf16.mxu0 0
    %287 = vmatmul.mubr.bf16.gmra.mrb[0].mxu0 %v249
    %v288 = vpop.f32.mrb[0].mxu0
    %v289 = vadd.f32 0.0, %v288
    %v290 = vpop.f32.mrb[0].mxu0
    %v291 = vpop.f32.mrb[0].mxu0
    %v292 = vpop.f32.mrb[0].mxu0
    %293 = vdwg.mxu0
    %v294 = vmul.f32 %v289, 0.35355338
    %v295 = vsel %vm135, %v294, -inf
    %296 = vmax.xlane.f32.xlu0 %v295
    %v297 = vpop.xlane.xlu0 %296
    %v298 = vsub.f32 %v294, %v297
    %v299 = vmul.f32 %v298, 1.442695
    %v300 = vpow.pop %v299
    %v301 = vsel %vm135, %v300, 0.0
    %302 = vadd.xlane.f32.xlu0 %v301
    %v303 = vpop.xlane.xlu0 %302
    %v304 = vrcp.pop %v303
    %v305 = vmul.f32 %v300, %v304
    %v306 = vpack.c.bf16 %v305, %v305
    %307 = vrot.lane.b32.xlu0 %v131, 56
    %v308 = vpop.permute.xlu0 %307
    %v310 = vsel %vm135, %v306, 0
    %v313 = vsel %vm200, %v308, 0
    %315 = vmatprep.subr.bf16.mxu0 0
    %316 = vmatpush1.bf16.msra.mxu0 %v313
    %317 = vmatprep.subr.bf16.mxu0 0
    %318 = vmatpush1.bf16.msra.mxu0 0
    %319 = vmatprep.subr.bf16.mxu0 0
    %320 = vmatpush1.bf16.msra.mxu0 0
    %321 = vmatprep.subr.bf16.mxu0 0
    %322 = vmatpush1.bf16.msra.mxu0 0
    %323 = vmatprep.subr.bf16.mxu0 0
    %324 = vmatpush1.bf16.msra.mxu0 0
    %325 = vmatprep.subr.bf16.mxu0 0
    %326 = vmatpush1.bf16.msra.mxu0 0
    %327 = vmatprep.subr.bf16.mxu0 0
    %328 = vmatpush1.bf16.msra.mxu0 0
    %329 = vmatprep.subr.bf16.mxu0 0
    %330 = vmatpush1.bf16.msra.mxu0 0
    %331 = vmatprep.subr.bf16.mxu0 0
    %332 = vmatpush1.bf16.msra.mxu0 0
    %333 = vmatprep.subr.bf16.mxu0 0
    %334 = vmatpush1.bf16.msra.mxu0 0
    %335 = vmatprep.subr.bf16.mxu0 0
    %336 = vmatpush1.bf16.msra.mxu0 0
    %337 = vmatprep.subr.bf16.mxu0 0
    %338 = vmatpush1.bf16.msra.mxu0 0
    %339 = vmatprep.subr.bf16.mxu0 0
    %340 = vmatpush1.bf16.msra.mxu0 0
    %341 = vmatprep.subr.bf16.mxu0 0
    %342 = vmatpush1.bf16.msra.mxu0 0
    %343 = vmatprep.subr.bf16.mxu0 0
    %344 = vmatpush1.bf16.msra.mxu0 0
    %345 = vmatprep.subr.bf16.mxu0 0
    %346 = vmatpush1.bf16.msra.mxu0 0
    %347 = vmatprep.mubr.bf16.mxu0 0
    %348 = vmatmul.mubr.bf16.gmra.mrb[0].mxu0 %v310
    %v349 = vpop.f32.mrb[0].mxu0
    %v350 = vadd.f32 0.0, %v349
    %v351 = vpop.f32.mrb[0].mxu0
    %v352 = vpop.f32.mrb[0].mxu0
    %v353 = vpop.f32.mrb[0].mxu0
    %354 = vdwg.mxu0
    %355 = vrot.lane.b32.xlu0 %v131, 112
    %v356 = vpop.permute.xlu0 %355
    %357 = vrot.lane.b32.xlu0 %v131, 80
    %v358 = vpop.permute.xlu0 %357
    %v360 = vsel %vm135, %v356, 0
    %v363 = vsel %vm135, %v358, 0
    %365 = vmatprep.subr.bf16.mxu0 0
    %366 = vmatpush1.bf16.xpose.msra.mxu0 %v363
    %367 = vmatprep.subr.bf16.mxu0 0
    %368 = vmatpush1.bf16.xpose.msra.mxu0 0
    %369 = vmatprep.subr.bf16.mxu0 0
    %370 = vmatpush1.bf16.xpose.msra.mxu0 0
    %371 = vmatprep.subr.bf16.mxu0 0
    %372 = vmatpush1.bf16.xpose.msra.mxu0 0
    %373 = vmatprep.subr.bf16.mxu0 0
    %374 = vmatpush1.bf16.xpose.msra.mxu0 0
    %375 = vmatprep.subr.bf16.mxu0 0
    %376 = vmatpush1.bf16.xpose.msra.mxu0 0
    %377 = vmatprep.subr.bf16.mxu0 0
    %378 = vmatpush1.bf16.xpose.msra.mxu0 0
    %379 = vmatprep.subr.bf16.mxu0 0
    %380 = vmatpush1.bf16.xpose.msra.mxu0 0
    %381 = vmatprep.subr.bf16.mxu0 0
    %382 = vmatpush1.bf16.xpose.msra.mxu0 0
    %383 = vmatprep.subr.bf16.mxu0 0
    %384 = vmatpush1.bf16.xpose.msra.mxu0 0
    %385 = vmatprep.subr.bf16.mxu0 0
    %386 = vmatpush1.bf16.xpose.msra.mxu0 0
    %387 = vmatprep.subr.bf16.mxu0 0
    %388 = vmatpush1.bf16.xpose.msra.mxu0 0
    %389 = vmatprep.subr.bf16.mxu0 0
    %390 = vmatpush1.bf16.xpose.msra.mxu0 0
    %391 = vmatprep.subr.bf16.mxu0 0
    %392 = vmatpush1.bf16.xpose.msra.mxu0 0
    %393 = vmatprep.subr.bf16.mxu0 0
    %394 = vmatpush1.bf16.xpose.msra.mxu0 0
    %395 = vmatprep.subr.bf16.mxu0 0
    %396 = vmatpush1.bf16.xpose.msra.mxu0 0
    %397 = vmatprep.mubr.bf16.mxu0 0
    %398 = vmatmul.mubr.bf16.gmra.mrb[0].mxu0 %v360
    %v399 = vpop.f32.mrb[0].mxu0
    %v400 = vadd.f32 0.0, %v399
    %v401 = vpop.f32.mrb[0].mxu0
    %v402 = vpop.f32.mrb[0].mxu0
    %v403 = vpop.f32.mrb[0].mxu0
    %404 = vdwg.mxu0
    %v405 = vmul.f32 %v400, 0.35355338
    %v406 = vsel %vm135, %v405, -inf
    %407 = vmax.xlane.f32.xlu0 %v406
    %v408 = vpop.xlane.xlu0 %407
    %v409 = vsub.f32 %v405, %v408
    %v410 = vmul.f32 %v409, 1.442695
    %v411 = vpow.pop %v410
    %v412 = vsel %vm135, %v411, 0.0
    %413 = vadd.xlane.f32.xlu0 %v412
    %v414 = vpop.xlane.xlu0 %413
    %v415 = vrcp.pop %v414
    %v416 = vmul.f32 %v411, %v415
    %v417 = vpack.c.bf16 %v416, %v416
    %418 = vrot.lane.b32.xlu0 %v131, 48
    %v419 = vpop.permute.xlu0 %418
    %v421 = vsel %vm135, %v417, 0
    %v424 = vsel %vm200, %v419, 0
    %426 = vmatprep.subr.bf16.mxu0 0
    %427 = vmatpush1.bf16.msra.mxu0 %v424
    %428 = vmatprep.subr.bf16.mxu0 0
    %429 = vmatpush1.bf16.msra.mxu0 0
    %430 = vmatprep.subr.bf16.mxu0 0
    %431 = vmatpush1.bf16.msra.mxu0 0
    %432 = vmatprep.subr.bf16.mxu0 0
    %433 = vmatpush1.bf16.msra.mxu0 0
    %434 = vmatprep.subr.bf16.mxu0 0
    %435 = vmatpush1.bf16.msra.mxu0 0
    %436 = vmatprep.subr.bf16.mxu0 0
    %437 = vmatpush1.bf16.msra.mxu0 0
    %438 = vmatprep.subr.bf16.mxu0 0
    %439 = vmatpush1.bf16.msra.mxu0 0
    %440 = vmatprep.subr.bf16.mxu0 0
    %441 = vmatpush1.bf16.msra.mxu0 0
    %442 = vmatprep.subr.bf16.mxu0 0
    %443 = vmatpush1.bf16.msra.mxu0 0
    %444 = vmatprep.subr.bf16.mxu0 0
    %445 = vmatpush1.bf16.msra.mxu0 0
    %446 = vmatprep.subr.bf16.mxu0 0
    %447 = vmatpush1.bf16.msra.mxu0 0
    %448 = vmatprep.subr.bf16.mxu0 0
    %449 = vmatpush1.bf16.msra.mxu0 0
    %450 = vmatprep.subr.bf16.mxu0 0
    %451 = vmatpush1.bf16.msra.mxu0 0
    %452 = vmatprep.subr.bf16.mxu0 0
    %453 = vmatpush1.bf16.msra.mxu0 0
    %454 = vmatprep.subr.bf16.mxu0 0
    %455 = vmatpush1.bf16.msra.mxu0 0
    %456 = vmatprep.subr.bf16.mxu0 0
    %457 = vmatpush1.bf16.msra.mxu0 0
    %458 = vmatprep.mubr.bf16.mxu0 0
    %459 = vmatmul.mubr.bf16.gmra.mrb[0].mxu0 %v421
    %v460 = vpop.f32.mrb[0].mxu0
    %v461 = vadd.f32 0.0, %v460
    %v462 = vpop.f32.mrb[0].mxu0
    %v463 = vpop.f32.mrb[0].mxu0
    %v464 = vpop.f32.mrb[0].mxu0
    %465 = vdwg.mxu0
    %466 = vrot.lane.b32.xlu0 %v131, 104
    %v467 = vpop.permute.xlu0 %466
    %468 = vrot.lane.b32.xlu0 %v131, 72
    %v469 = vpop.permute.xlu0 %468
    %v471 = vsel %vm135, %v467, 0
    %v474 = vsel %vm135, %v469, 0
    %476 = vmatprep.subr.bf16.mxu0 0
    %477 = vmatpush1.bf16.xpose.msra.mxu0 %v474
    %478 = vmatprep.subr.bf16.mxu0 0
    %479 = vmatpush1.bf16.xpose.msra.mxu0 0
    %480 = vmatprep.subr.bf16.mxu0 0
    %481 = vmatpush1.bf16.xpose.msra.mxu0 0
    %482 = vmatprep.subr.bf16.mxu0 0
    %483 = vmatpush1.bf16.xpose.msra.mxu0 0
    %484 = vmatprep.subr.bf16.mxu0 0
    %485 = vmatpush1.bf16.xpose.msra.mxu0 0
    %486 = vmatprep.subr.bf16.mxu0 0
    %487 = vmatpush1.bf16.xpose.msra.mxu0 0
    %488 = vmatprep.subr.bf16.mxu0 0
    %489 = vmatpush1.bf16.xpose.msra.mxu0 0
    %490 = vmatprep.subr.bf16.mxu0 0
    %491 = vmatpush1.bf16.xpose.msra.mxu0 0
    %492 = vmatprep.subr.bf16.mxu0 0
    %493 = vmatpush1.bf16.xpose.msra.mxu0 0
    %494 = vmatprep.subr.bf16.mxu0 0
    %495 = vmatpush1.bf16.xpose.msra.mxu0 0
    %496 = vmatprep.subr.bf16.mxu0 0
    %497 = vmatpush1.bf16.xpose.msra.mxu0 0
    %498 = vmatprep.subr.bf16.mxu0 0
    %499 = vmatpush1.bf16.xpose.msra.mxu0 0
    %500 = vmatprep.subr.bf16.mxu0 0
    %501 = vmatpush1.bf16.xpose.msra.mxu0 0
    %502 = vmatprep.subr.bf16.mxu0 0
    %503 = vmatpush1.bf16.xpose.msra.mxu0 0
    %504 = vmatprep.subr.bf16.mxu0 0
    %505 = vmatpush1.bf16.xpose.msra.mxu0 0
    %506 = vmatprep.subr.bf16.mxu0 0
    %507 = vmatpush1.bf16.xpose.msra.mxu0 0
    %508 = vmatprep.mubr.bf16.mxu0 0
    %509 = vmatmul.mubr.bf16.gmra.mrb[0].mxu0 %v471
    %v510 = vpop.f32.mrb[0].mxu0
    %v511 = vadd.f32 0.0, %v510
    %v512 = vpop.f32.mrb[0].mxu0
    %v513 = vpop.f32.mrb[0].mxu0
    %v514 = vpop.f32.mrb[0].mxu0
    %515 = vdwg.mxu0
    %v516 = vmul.f32 %v511, 0.35355338
    %v517 = vsel %vm135, %v516, -inf
    %518 = vmax.xlane.f32.xlu0 %v517
    %v519 = vpop.xlane.xlu0 %518
    %v520 = vsub.f32 %v516, %v519
    %v521 = vmul.f32 %v520, 1.442695
    %v522 = vpow.pop %v521
    %v523 = vsel %vm135, %v522, 0.0
    %524 = vadd.xlane.f32.xlu0 %v523
    %v525 = vpop.xlane.xlu0 %524
    %v526 = vrcp.pop %v525
    %v527 = vmul.f32 %v522, %v526
    %v528 = vpack.c.bf16 %v527, %v527
    %529 = vrot.lane.b32.xlu0 %v131, 40
    %v530 = vpop.permute.xlu0 %529
    %v532 = vsel %vm135, %v528, 0
    %v535 = vsel %vm200, %v530, 0
    %537 = vmatprep.subr.bf16.mxu0 0
    %538 = vmatpush1.bf16.msra.mxu0 %v535
    %539 = vmatprep.subr.bf16.mxu0 0
    %540 = vmatpush1.bf16.msra.mxu0 0
    %541 = vmatprep.subr.bf16.mxu0 0
    %542 = vmatpush1.bf16.msra.mxu0 0
    %543 = vmatprep.subr.bf16.mxu0 0
    %544 = vmatpush1.bf16.msra.mxu0 0
    %545 = vmatprep.subr.bf16.mxu0 0
    %546 = vmatpush1.bf16.msra.mxu0 0
    %547 = vmatprep.subr.bf16.mxu0 0
    %548 = vmatpush1.bf16.msra.mxu0 0
    %549 = vmatprep.subr.bf16.mxu0 0
    %550 = vmatpush1.bf16.msra.mxu0 0
    %551 = vmatprep.subr.bf16.mxu0 0
    %552 = vmatpush1.bf16.msra.mxu0 0
    %553 = vmatprep.subr.bf16.mxu0 0
    %554 = vmatpush1.bf16.msra.mxu0 0
    %555 = vmatprep.subr.bf16.mxu0 0
    %556 = vmatpush1.bf16.msra.mxu0 0
    %557 = vmatprep.subr.bf16.mxu0 0
    %558 = vmatpush1.bf16.msra.mxu0 0
    %559 = vmatprep.subr.bf16.mxu0 0
    %560 = vmatpush1.bf16.msra.mxu0 0
    %561 = vmatprep.subr.bf16.mxu0 0
    %562 = vmatpush1.bf16.msra.mxu0 0
    %563 = vmatprep.subr.bf16.mxu0 0
    %564 = vmatpush1.bf16.msra.mxu0 0
    %565 = vmatprep.subr.bf16.mxu0 0
    %566 = vmatpush1.bf16.msra.mxu0 0
    %567 = vmatprep.subr.bf16.mxu0 0
    %568 = vmatpush1.bf16.msra.mxu0 0
    %569 = vmatprep.mubr.bf16.mxu0 0
    %570 = vmatmul.mubr.bf16.gmra.mrb[0].mxu0 %v532
    %v571 = vpop.f32.mrb[0].mxu0
    %v572 = vadd.f32 0.0, %v571
    %v573 = vpop.f32.mrb[0].mxu0
    %v574 = vpop.f32.mrb[0].mxu0
    %v575 = vpop.f32.mrb[0].mxu0
    %576 = vdwg.mxu0
    %578 = vrot.lane.b32.xlu0 %v350, 8
    %v579 = vpop.permute.xlu0 %578
    %582 = vrot.lane.b32.xlu0 %v461, 16
    %v583 = vpop.permute.xlu0 %582
    %586 = vrot.lane.b32.xlu0 %v572, 24
    %v587 = vpop.permute.xlu0 %586
    %v589 = vsel %vm135, %v239, %v579
    %vm590 = vcmask 130048
    %v591 = vsel %vm590, %v589, %v583
    %vm592 = vcmask 195584
    %v593 = vsel %vm592, %v591, %v587
    %v594 = vpack.c.bf16 %v128, %v128
    %596 = vrot.lane.b32.xlu0 %v594, 96
    %v597 = vpop.permute.xlu0 %596
    %v599 = vsel %vm135, %v594, 0
    %v602 = vsel %vm135, %v597, 0
    %604 = vmatprep.subr.bf16.mxu0 0
    %605 = vmatpush1.bf16.xpose.msra.mxu0 %v602
    %606 = vmatprep.subr.bf16.mxu0 0
    %607 = vmatpush1.bf16.xpose.msra.mxu0 0
    %608 = vmatprep.subr.bf16.mxu0 0
    %609 = vmatpush1.bf16.xpose.msra.mxu0 0
    %610 = vmatprep.subr.bf16.mxu0 0
    %611 = vmatpush1.bf16.xpose.msra.mxu0 0
    %612 = vmatprep.subr.bf16.mxu0 0
    %613 = vmatpush1.bf16.xpose.msra.mxu0 0
    %614 = vmatprep.subr.bf16.mxu0 0
    %615 = vmatpush1.bf16.xpose.msra.mxu0 0
    %616 = vmatprep.subr.bf16.mxu0 0
    %617 = vmatpush1.bf16.xpose.msra.mxu0 0
    %618 = vmatprep.subr.bf16.mxu0 0
    %619 = vmatpush1.bf16.xpose.msra.mxu0 0
    %620 = vmatprep.subr.bf16.mxu0 0
    %621 = vmatpush1.bf16.xpose.msra.mxu0 0
    %622 = vmatprep.subr.bf16.mxu0 0
    %623 = vmatpush1.bf16.xpose.msra.mxu0 0
    %624 = vmatprep.subr.bf16.mxu0 0
    %625 = vmatpush1.bf16.xpose.msra.mxu0 0
    %626 = vmatprep.subr.bf16.mxu0 0
    %627 = vmatpush1.bf16.xpose.msra.mxu0 0
    %628 = vmatprep.subr.bf16.mxu0 0
    %629 = vmatpush1.bf16.xpose.msra.mxu0 0
    %630 = vmatprep.subr.bf16.mxu0 0
    %631 = vmatpush1.bf16.xpose.msra.mxu0 0
    %632 = vmatprep.subr.bf16.mxu0 0
    %633 = vmatpush1.bf16.xpose.msra.mxu0 0
    %634 = vmatprep.subr.bf16.mxu0 0
    %635 = vmatpush1.bf16.xpose.msra.mxu0 0
    %636 = vmatprep.mubr.bf16.mxu0 0
    %637 = vmatmul.mubr.bf16.gmra.mrb[0].mxu0 %v599
    %v638 = vpop.f32.mrb[0].mxu0
    %v639 = vadd.f32 0.0, %v638
    %v640 = vpop.f32.mrb[0].mxu0
    %v641 = vpop.f32.mrb[0].mxu0
    %v642 = vpop.f32.mrb[0].mxu0
    %643 = vdwg.mxu0
    %v644 = vmul.f32 %v639, 0.35355338
    %v645 = vsel %vm135, %v644, -inf
    %646 = vmax.xlane.f32.xlu0 %v645
    %v647 = vpop.xlane.xlu0 %646
    %v648 = vsub.f32 %v644, %v647
    %v649 = vmul.f32 %v648, 1.442695
    %v650 = vpow.pop %v649
    %v651 = vsel %vm135, %v650, 0.0
    %652 = vadd.xlane.f32.xlu0 %v651
    %v653 = vpop.xlane.xlu0 %652
    %v654 = vrcp.pop %v653
    %v655 = vmul.f32 %v650, %v654
    %v656 = vpack.c.bf16 %v655, %v655
    %657 = vrot.lane.b32.xlu0 %v594, 64
    %v658 = vpop.permute.xlu0 %657
    %v660 = vsel %vm135, %v656, 0
    %v663 = vsel %vm200, %v658, 0
    %665 = vmatprep.subr.bf16.mxu0 0
    %666 = vmatpush1.bf16.msra.mxu0 %v663
    %667 = vmatprep.subr.bf16.mxu0 0
    %668 = vmatpush1.bf16.msra.mxu0 0
    %669 = vmatprep.subr.bf16.mxu0 0
    %670 = vmatpush1.bf16.msra.mxu0 0
    %671 = vmatprep.subr.bf16.mxu0 0
    %672 = vmatpush1.bf16.msra.mxu0 0
    %673 = vmatprep.subr.bf16.mxu0 0
    %674 = vmatpush1.bf16.msra.mxu0 0
    %675 = vmatprep.subr.bf16.mxu0 0
    %676 = vmatpush1.bf16.msra.mxu0 0
    %677 = vmatprep.subr.bf16.mxu0 0
    %678 = vmatpush1.bf16.msra.mxu0 0
    %679 = vmatprep.subr.bf16.mxu0 0
    %680 = vmatpush1.bf16.msra.mxu0 0
    %681 = vmatprep.subr.bf16.mxu0 0
    %682 = vmatpush1.bf16.msra.mxu0 0
    %683 = vmatprep.subr.bf16.mxu0 0
    %684 = vmatpush1.bf16.msra.mxu0 0
    %685 = vmatprep.subr.bf16.mxu0 0
    %686 = vmatpush1.bf16.msra.mxu0 0
    %687 = vmatprep.subr.bf16.mxu0 0
    %688 = vmatpush1.bf16.msra.mxu0 0
    %689 = vmatprep.subr.bf16.mxu0 0
    %690 = vmatpush1.bf16.msra.mxu0 0
    %691 = vmatprep.subr.bf16.mxu0 0
    %692 = vmatpush1.bf16.msra.mxu0 0
    %693 = vmatprep.subr.bf16.mxu0 0
    %694 = vmatpush1.bf16.msra.mxu0 0
    %695 = vmatprep.subr.bf16.mxu0 0
    %696 = vmatpush1.bf16.msra.mxu0 0
    %697 = vmatprep.mubr.bf16.mxu0 0
    %698 = vmatmul.mubr.bf16.gmra.mrb[0].mxu0 %v660
    %v699 = vpop.f32.mrb[0].mxu0
    %v700 = vadd.f32 0.0, %v699
    %v701 = vpop.f32.mrb[0].mxu0
    %v702 = vpop.f32.mrb[0].mxu0
    %v703 = vpop.f32.mrb[0].mxu0
    %704 = vdwg.mxu0
    %705 = vrot.lane.b32.xlu0 %v594, 120
    %v706 = vpop.permute.xlu0 %705
    %707 = vrot.lane.b32.xlu0 %v594, 88
    %v708 = vpop.permute.xlu0 %707
    %v710 = vsel %vm135, %v706, 0
    %v713 = vsel %vm135, %v708, 0
    %715 = vmatprep.subr.bf16.mxu0 0
    %716 = vmatpush1.bf16.xpose.msra.mxu0 %v713
    %717 = vmatprep.subr.bf16.mxu0 0
    %718 = vmatpush1.bf16.xpose.msra.mxu0 0
    %719 = vmatprep.subr.bf16.mxu0 0
    %720 = vmatpush1.bf16.xpose.msra.mxu0 0
    %721 = vmatprep.subr.bf16.mxu0 0
    %722 = vmatpush1.bf16.xpose.msra.mxu0 0
    %723 = vmatprep.subr.bf16.mxu0 0
    %724 = vmatpush1.bf16.xpose.msra.mxu0 0
    %725 = vmatprep.subr.bf16.mxu0 0
    %726 = vmatpush1.bf16.xpose.msra.mxu0 0
    %727 = vmatprep.subr.bf16.mxu0 0
    %728 = vmatpush1.bf16.xpose.msra.mxu0 0
    %729 = vmatprep.subr.bf16.mxu0 0
    %730 = vmatpush1.bf16.xpose.msra.mxu0 0
    %731 = vmatprep.subr.bf16.mxu0 0
    %732 = vmatpush1.bf16.xpose.msra.mxu0 0
    %733 = vmatprep.subr.bf16.mxu0 0
    %734 = vmatpush1.bf16.xpose.msra.mxu0 0
    %735 = vmatprep.subr.bf16.mxu0 0
    %736 = vmatpush1.bf16.xpose.msra.mxu0 0
    %737 = vmatprep.subr.bf16.mxu0 0
    %738 = vmatpush1.bf16.xpose.msra.mxu0 0
    %739 = vmatprep.subr.bf16.mxu0 0
    %740 = vmatpush1.bf16.xpose.msra.mxu0 0
    %741 = vmatprep.subr.bf16.mxu0 0
    %742 = vmatpush1.bf16.xpose.msra.mxu0 0
    %743 = vmatprep.subr.bf16.mxu0 0
    %744 = vmatpush1.bf16.xpose.msra.mxu0 0
    %745 = vmatprep.subr.bf16.mxu0 0
    %746 = vmatpush1.bf16.xpose.msra.mxu0 0
    %747 = vmatprep.mubr.bf16.mxu0 0
    %748 = vmatmul.mubr.bf16.gmra.mrb[0].mxu0 %v710
    %v749 = vpop.f32.mrb[0].mxu0
    %v750 = vadd.f32 0.0, %v749
    %v751 = vpop.f32.mrb[0].mxu0
    %v752 = vpop.f32.mrb[0].mxu0
    %v753 = vpop.f32.mrb[0].mxu0
    %754 = vdwg.mxu0
    %v755 = vmul.f32 %v750, 0.35355338
    %v756 = vsel %vm135, %v755, -inf
    %757 = vmax.xlane.f32.xlu0 %v756
    %v758 = vpop.xlane.xlu0 %757
    %v759 = vsub.f32 %v755, %v758
    %v760 = vmul.f32 %v759, 1.442695
    %v761 = vpow.pop %v760
    %v762 = vsel %vm135, %v761, 0.0
    %763 = vadd.xlane.f32.xlu0 %v762
    %v764 = vpop.xlane.xlu0 %763
    %v765 = vrcp.pop %v764
    %v766 = vmul.f32 %v761, %v765
    %v767 = vpack.c.bf16 %v766, %v766
    %768 = vrot.lane.b32.xlu0 %v594, 56
    %v769 = vpop.permute.xlu0 %768
    %v771 = vsel %vm135, %v767, 0
    %v774 = vsel %vm200, %v769, 0
    %776 = vmatprep.subr.bf16.mxu0 0
    %777 = vmatpush1.bf16.msra.mxu0 %v774
    %778 = vmatprep.subr.bf16.mxu0 0
    %779 = vmatpush1.bf16.msra.mxu0 0
    %780 = vmatprep.subr.bf16.mxu0 0
    %781 = vmatpush1.bf16.msra.mxu0 0
    %782 = vmatprep.subr.bf16.mxu0 0
    %783 = vmatpush1.bf16.msra.mxu0 0
    %784 = vmatprep.subr.bf16.mxu0 0
    %785 = vmatpush1.bf16.msra.mxu0 0
    %786 = vmatprep.subr.bf16.mxu0 0
    %787 = vmatpush1.bf16.msra.mxu0 0
    %788 = vmatprep.subr.bf16.mxu0 0
    %789 = vmatpush1.bf16.msra.mxu0 0
    %790 = vmatprep.subr.bf16.mxu0 0
    %791 = vmatpush1.bf16.msra.mxu0 0
    %792 = vmatprep.subr.bf16.mxu0 0
    %793 = vmatpush1.bf16.msra.mxu0 0
    %794 = vmatprep.subr.bf16.mxu0 0
    %795 = vmatpush1.bf16.msra.mxu0 0
    %796 = vmatprep.subr.bf16.mxu0 0
    %797 = vmatpush1.bf16.msra.mxu0 0
    %798 = vmatprep.subr.bf16.mxu0 0
    %799 = vmatpush1.bf16.msra.mxu0 0
    %800 = vmatprep.subr.bf16.mxu0 0
    %801 = vmatpush1.bf16.msra.mxu0 0
    %802 = vmatprep.subr.bf16.mxu0 0
    %803 = vmatpush1.bf16.msra.mxu0 0
    %804 = vmatprep.subr.bf16.mxu0 0
    %805 = vmatpush1.bf16.msra.mxu0 0
    %806 = vmatprep.subr.bf16.mxu0 0
    %807 = vmatpush1.bf16.msra.mxu0 0
    %808 = vmatprep.mubr.bf16.mxu0 0
    %809 = vmatmul.mubr.bf16.gmra.mrb[0].mxu0 %v771
    %v810 = vpop.f32.mrb[0].mxu0
    %v811 = vadd.f32 0.0, %v810
    %v812 = vpop.f32.mrb[0].mxu0
    %v813 = vpop.f32.mrb[0].mxu0
    %v814 = vpop.f32.mrb[0].mxu0
    %815 = vdwg.mxu0
    %816 = vrot.lane.b32.xlu0 %v594, 112
    %v817 = vpop.permute.xlu0 %816
    %818 = vrot.lane.b32.xlu0 %v594, 80
    %v819 = vpop.permute.xlu0 %818
    %v821 = vsel %vm135, %v817, 0
    %v824 = vsel %vm135, %v819, 0
    %826 = vmatprep.subr.bf16.mxu0 0
    %827 = vmatpush1.bf16.xpose.msra.mxu0 %v824
    %828 = vmatprep.subr.bf16.mxu0 0
    %829 = vmatpush1.bf16.xpose.msra.mxu0 0
    %830 = vmatprep.subr.bf16.mxu0 0
    %831 = vmatpush1.bf16.xpose.msra.mxu0 0
    %832 = vmatprep.subr.bf16.mxu0 0
    %833 = vmatpush1.bf16.xpose.msra.mxu0 0
    %834 = vmatprep.subr.bf16.mxu0 0
    %835 = vmatpush1.bf16.xpose.msra.mxu0 0
    %836 = vmatprep.subr.bf16.mxu0 0
    %837 = vmatpush1.bf16.xpose.msra.mxu0 0
    %838 = vmatprep.subr.bf16.mxu0 0
    %839 = vmatpush1.bf16.xpose.msra.mxu0 0
    %840 = vmatprep.subr.bf16.mxu0 0
    %841 = vmatpush1.bf16.xpose.msra.mxu0 0
    %842 = vmatprep.subr.bf16.mxu0 0
    %843 = vmatpush1.bf16.xpose.msra.mxu0 0
    %844 = vmatprep.subr.bf16.mxu0 0
    %845 = vmatpush1.bf16.xpose.msra.mxu0 0
    %846 = vmatprep.subr.bf16.mxu0 0
    %847 = vmatpush1.bf16.xpose.msra.mxu0 0
    %848 = vmatprep.subr.bf16.mxu0 0
    %849 = vmatpush1.bf16.xpose.msra.mxu0 0
    %850 = vmatprep.subr.bf16.mxu0 0
    %851 = vmatpush1.bf16.xpose.msra.mxu0 0
    %852 = vmatprep.subr.bf16.mxu0 0
    %853 = vmatpush1.bf16.xpose.msra.mxu0 0
    %854 = vmatprep.subr.bf16.mxu0 0
    %855 = vmatpush1.bf16.xpose.msra.mxu0 0
    %856 = vmatprep.subr.bf16.mxu0 0
    %857 = vmatpush1.bf16.xpose.msra.mxu0 0
    %858 = vmatprep.mubr.bf16.mxu0 0
    %859 = vmatmul.mubr.bf16.gmra.mrb[0].mxu0 %v821
    %v860 = vpop.f32.mrb[0].mxu0
    %v861 = vadd.f32 0.0, %v860
    %v862 = vpop.f32.mrb[0].mxu0
    %v863 = vpop.f32.mrb[0].mxu0
    %v864 = vpop.f32.mrb[0].mxu0
    %865 = vdwg.mxu0
    %v866 = vmul.f32 %v861, 0.35355338
    %v867 = vsel %vm135, %v866, -inf
    %868 = vmax.xlane.f32.xlu0 %v867
    %v869 = vpop.xlane.xlu0 %868
    %v870 = vsub.f32 %v866, %v869
    %v871 = vmul.f32 %v870, 1.442695
    %v872 = vpow.pop %v871
    %v873 = vsel %vm135, %v872, 0.0
    %874 = vadd.xlane.f32.xlu0 %v873
    %v875 = vpop.xlane.xlu0 %874
    %v876 = vrcp.pop %v875
    %v877 = vmul.f32 %v872, %v876
    %v878 = vpack.c.bf16 %v877, %v877
    %879 = vrot.lane.b32.xlu0 %v594, 48
    %v880 = vpop.permute.xlu0 %879
    %v882 = vsel %vm135, %v878, 0
    %v885 = vsel %vm200, %v880, 0
    %887 = vmatprep.subr.bf16.mxu0 0
    %888 = vmatpush1.bf16.msra.mxu0 %v885
    %889 = vmatprep.subr.bf16.mxu0 0
    %890 = vmatpush1.bf16.msra.mxu0 0
    %891 = vmatprep.subr.bf16.mxu0 0
    %892 = vmatpush1.bf16.msra.mxu0 0
    %893 = vmatprep.subr.bf16.mxu0 0
    %894 = vmatpush1.bf16.msra.mxu0 0
    %895 = vmatprep.subr.bf16.mxu0 0
    %896 = vmatpush1.bf16.msra.mxu0 0
    %897 = vmatprep.subr.bf16.mxu0 0
    %898 = vmatpush1.bf16.msra.mxu0 0
    %899 = vmatprep.subr.bf16.mxu0 0
    %900 = vmatpush1.bf16.msra.mxu0 0
    %901 = vmatprep.subr.bf16.mxu0 0
    %902 = vmatpush1.bf16.msra.mxu0 0
    %903 = vmatprep.subr.bf16.mxu0 0
    %904 = vmatpush1.bf16.msra.mxu0 0
    %905 = vmatprep.subr.bf16.mxu0 0
    %906 = vmatpush1.bf16.msra.mxu0 0
    %907 = vmatprep.subr.bf16.mxu0 0
    %908 = vmatpush1.bf16.msra.mxu0 0
    %909 = vmatprep.subr.bf16.mxu0 0
    %910 = vmatpush1.bf16.msra.mxu0 0
    %911 = vmatprep.subr.bf16.mxu0 0
    %912 = vmatpush1.bf16.msra.mxu0 0
    %913 = vmatprep.subr.bf16.mxu0 0
    %914 = vmatpush1.bf16.msra.mxu0 0
    %915 = vmatprep.subr.bf16.mxu0 0
    %916 = vmatpush1.bf16.msra.mxu0 0
    %917 = vmatprep.subr.bf16.mxu0 0
    %918 = vmatpush1.bf16.msra.mxu0 0
    %919 = vmatprep.mubr.bf16.mxu0 0
    %920 = vmatmul.mubr.bf16.gmra.mrb[0].mxu0 %v882
    %v921 = vpop.f32.mrb[0].mxu0
    %v922 = vadd.f32 0.0, %v921
    %v923 = vpop.f32.mrb[0].mxu0
    %v924 = vpop.f32.mrb[0].mxu0
    %v925 = vpop.f32.mrb[0].mxu0
    %926 = vdwg.mxu0
    %927 = vrot.lane.b32.xlu0 %v594, 104
    %v928 = vpop.permute.xlu0 %927
    %929 = vrot.lane.b32.xlu0 %v594, 72
    %v930 = vpop.permute.xlu0 %929
    %v932 = vsel %vm135, %v928, 0
    %v935 = vsel %vm135, %v930, 0
    %937 = vmatprep.subr.bf16.mxu0 0
    %938 = vmatpush1.bf16.xpose.msra.mxu0 %v935
    %939 = vmatprep.subr.bf16.mxu0 0
    %940 = vmatpush1.bf16.xpose.msra.mxu0 0
    %941 = vmatprep.subr.bf16.mxu0 0
    %942 = vmatpush1.bf16.xpose.msra.mxu0 0
    %943 = vmatprep.subr.bf16.mxu0 0
    %944 = vmatpush1.bf16.xpose.msra.mxu0 0
    %945 = vmatprep.subr.bf16.mxu0 0
    %946 = vmatpush1.bf16.xpose.msra.mxu0 0
    %947 = vmatprep.subr.bf16.mxu0 0
    %948 = vmatpush1.bf16.xpose.msra.mxu0 0
    %949 = vmatprep.subr.bf16.mxu0 0
    %950 = vmatpush1.bf16.xpose.msra.mxu0 0
    %951 = vmatprep.subr.bf16.mxu0 0
    %952 = vmatpush1.bf16.xpose.msra.mxu0 0
    %953 = vmatprep.subr.bf16.mxu0 0
    %954 = vmatpush1.bf16.xpose.msra.mxu0 0
    %955 = vmatprep.subr.bf16.mxu0 0
    %956 = vmatpush1.bf16.xpose.msra.mxu0 0
    %957 = vmatprep.subr.bf16.mxu0 0
    %958 = vmatpush1.bf16.xpose.msra.mxu0 0
    %959 = vmatprep.subr.bf16.mxu0 0
    %960 = vmatpush1.bf16.xpose.msra.mxu0 0
    %961 = vmatprep.subr.bf16.mxu0 0
    %962 = vmatpush1.bf16.xpose.msra.mxu0 0
    %963 = vmatprep.subr.bf16.mxu0 0
    %964 = vmatpush1.bf16.xpose.msra.mxu0 0
    %965 = vmatprep.subr.bf16.mxu0 0
    %966 = vmatpush1.bf16.xpose.msra.mxu0 0
    %967 = vmatprep.subr.bf16.mxu0 0
    %968 = vmatpush1.bf16.xpose.msra.mxu0 0
    %969 = vmatprep.mubr.bf16.mxu0 0
    %970 = vmatmul.mubr.bf16.gmra.mrb[0].mxu0 %v932
    %v971 = vpop.f32.mrb[0].mxu0
    %v972 = vadd.f32 0.0, %v971
    %v973 = vpop.f32.mrb[0].mxu0
    %v974 = vpop.f32.mrb[0].mxu0
    %v975 = vpop.f32.mrb[0].mxu0
    %976 = vdwg.mxu0
    %v977 = vmul.f32 %v972, 0.35355338
    %v978 = vsel %vm135, %v977, -inf
    %979 = vmax.xlane.f32.xlu0 %v978
    %v980 = vpop.xlane.xlu0 %979
    %v981 = vsub.f32 %v977, %v980
    %v982 = vmul.f32 %v981, 1.442695
    %v983 = vpow.pop %v982
    %v984 = vsel %vm135, %v983, 0.0
    %985 = vadd.xlane.f32.xlu0 %v984
    %v986 = vpop.xlane.xlu0 %985
    %v987 = vrcp.pop %v986
    %v988 = vmul.f32 %v983, %v987
    %v989 = vpack.c.bf16 %v988, %v988
    %990 = vrot.lane.b32.xlu0 %v594, 40
    %v991 = vpop.permute.xlu0 %990
    %v993 = vsel %vm135, %v989, 0
    %v996 = vsel %vm200, %v991, 0
    %998 = vmatprep.subr.bf16.mxu0 0
    %999 = vmatpush1.bf16.msra.mxu0 %v996
    %1000 = vmatprep.subr.bf16.mxu0 0
    %1001 = vmatpush1.bf16.msra.mxu0 0
    %1002 = vmatprep.subr.bf16.mxu0 0
    %1003 = vmatpush1.bf16.msra.mxu0 0
    %1004 = vmatprep.subr.bf16.mxu0 0
    %1005 = vmatpush1.bf16.msra.mxu0 0
    %1006 = vmatprep.subr.bf16.mxu0 0
    %1007 = vmatpush1.bf16.msra.mxu0 0
    %1008 = vmatprep.subr.bf16.mxu0 0
    %1009 = vmatpush1.bf16.msra.mxu0 0
    %1010 = vmatprep.subr.bf16.mxu0 0
    %1011 = vmatpush1.bf16.msra.mxu0 0
    %1012 = vmatprep.subr.bf16.mxu0 0
    %1013 = vmatpush1.bf16.msra.mxu0 0
    %1014 = vmatprep.subr.bf16.mxu0 0
    %1015 = vmatpush1.bf16.msra.mxu0 0
    %1016 = vmatprep.subr.bf16.mxu0 0
    %1017 = vmatpush1.bf16.msra.mxu0 0
    %1018 = vmatprep.subr.bf16.mxu0 0
    %1019 = vmatpush1.bf16.msra.mxu0 0
    %1020 = vmatprep.subr.bf16.mxu0 0
    %1021 = vmatpush1.bf16.msra.mxu0 0
    %1022 = vmatprep.subr.bf16.mxu0 0
    %1023 = vmatpush1.bf16.msra.mxu0 0
    %1024 = vmatprep.subr.bf16.mxu0 0
    %1025 = vmatpush1.bf16.msra.mxu0 0
    %1026 = vmatprep.subr.bf16.mxu0 0
    %1027 = vmatpush1.bf16.msra.mxu0 0
    %1028 = vmatprep.subr.bf16.mxu0 0
    %1029 = vmatpush1.bf16.msra.mxu0 0
    %1030 = vmatprep.mubr.bf16.mxu0 0
    %1031 = vmatmul.mubr.bf16.gmra.mrb[0].mxu0 %v993
    %v1032 = vpop.f32.mrb[0].mxu0
    %v1033 = vadd.f32 0.0, %v1032
    %v1034 = vpop.f32.mrb[0].mxu0
    %v1035 = vpop.f32.mrb[0].mxu0
    %v1036 = vpop.f32.mrb[0].mxu0
    %1037 = vdwg.mxu0
    %1039 = vrot.lane.b32.xlu0 %v811, 8
    %v1040 = vpop.permute.xlu0 %1039
    %1043 = vrot.lane.b32.xlu0 %v922, 16
    %v1044 = vpop.permute.xlu0 %1043
    %1047 = vrot.lane.b32.xlu0 %v1033, 24
    %v1048 = vpop.permute.xlu0 %1047
    %v1050 = vsel %vm135, %v700, %v1040
    %v1051 = vsel %vm590, %v1050, %v1044
    %v1052 = vsel %vm592, %v1051, %v1048
    %v1053 = vpack.c.bf16 %v1052, %v593
    %v1054 = vld [vmem:[%s3] sm:$0xf]
    %v1055 = vld [vmem:[%s3 + $0x4] sm:$0xf]
    %v1056 = vld [vmem:[%s3 + $0x8] sm:$0xf]
    %v1057 = vld [vmem:[%s3 + $0xc] sm:$0xf]
    %v1058 = vld [vmem:[%s4] sm:$0x1]
    %v1060 = vlaneseq
    %v1061 = vshrl.u32 %v1060, 7
    %v1062 = vsub.s32 0, %v1061
    %v1063 = vrot.slane %v1058, %v1062
    %v1069 = vunpack.c.l.b16 %v1054
    %v1070 = vunpack.c.l.b16 %v1055
    %v1071 = vunpack.c.l.b16 %v1056
    %v1072 = vunpack.c.l.b16 %v1057
    %v1073 = vpack.c.b16 %v1070, %v1069
    %v1074 = vpack.c.b16 %v1072, %v1071
    %v1078 = vsel %vm86, %v1053, 0
    %1080 = vmatprep.subr.bf16.mxu0 0
    %1081 = vmatpush1.bf16.msra.mxu0 %v1073
    %1082 = vmatprep.subr.bf16.mxu0 0
    %1083 = vmatpush1.bf16.msra.mxu0 %v1074
    %1084 = vmatprep.subr.bf16.mxu0 0
    %1085 = vmatpush1.bf16.msra.mxu0 0
    %1086 = vmatprep.subr.bf16.mxu0 0
    %1087 = vmatpush1.bf16.msra.mxu0 0
    %1088 = vmatprep.subr.bf16.mxu0 0
    %1089 = vmatpush1.bf16.msra.mxu0 0
    %1090 = vmatprep.subr.bf16.mxu0 0
    %1091 = vmatpush1.bf16.msra.mxu0 0
    %1092 = vmatprep.subr.bf16.mxu0 0
    %1093 = vmatpush1.bf16.msra.mxu0 0
    %1094 = vmatprep.subr.bf16.mxu0 0
    %1095 = vmatpush1.bf16.msra.mxu0 0
    %1096 = vmatprep.subr.bf16.mxu0 0
    %1097 = vmatpush1.bf16.msra.mxu0 0
    %1098 = vmatprep.subr.bf16.mxu0 0
    %1099 = vmatpush1.bf16.msra.mxu0 0
    %1100 = vmatprep.subr.bf16.mxu0 0
    %1101 = vmatpush1.bf16.msra.mxu0 0
    %1102 = vmatprep.subr.bf16.mxu0 0
    %1103 = vmatpush1.bf16.msra.mxu0 0
    %1104 = vmatprep.subr.bf16.mxu0 0
    %1105 = vmatpush1.bf16.msra.mxu0 0
    %1106 = vmatprep.subr.bf16.mxu0 0
    %1107 = vmatpush1.bf16.msra.mxu0 0
    %1108 = vmatprep.subr.bf16.mxu0 0
    %1109 = vmatpush1.bf16.msra.mxu0 0
    %1110 = vmatprep.subr.bf16.mxu0 0
    %1111 = vmatpush1.bf16.msra.mxu0 0
    %1112 = vmatprep.mubr.bf16.mxu0 0
    %1113 = vmatmul.mubr.bf16.gmra.mrb[0].mxu0 %v1078
    %v1114 = vpop.f32.mrb[0].mxu0
    %v1115 = vadd.f32 %v1063, %v1114
    %v1116 = vpop.f32.mrb[0].mxu0
    %v1117 = vpop.f32.mrb[0].mxu0
    %v1118 = vadd.f32 %v1063, %v1117
    %v1119 = vpop.f32.mrb[0].mxu0
    %1120 = vdwg.mxu0
    %v1121 = vadd.f32 %v60, %v1115
    %v1122 = vadd.f32 %v61, %v1118
    %v1123 = vld [vmem:[%s5] sm:$0x1]
    %v1124 = vld [vmem:[%s6] sm:$0x1]
    %v1125 = vsel %vm86, %v1121, 0.0
    %1126 = vadd.xlane.f32.xlu0 %v1125
    %v1127 = vpop.xlane.xlu0 %1126
    %v1128 = vsel %vm86, %v1122, 0.0
    %1129 = vadd.xlane.f32.xlu0 %v1128
    %v1130 = vpop.xlane.xlu0 %1129
    %v1131 = vrcp.pop 32.0
    %v1132 = vmul.f32 %v1127, %v1131
    %v1133 = vmul.f32 %v1130, %v1131
    %v1134 = vsub.f32 %v1121, %v1132
    %v1135 = vsub.f32 %v1122, %v1133
    %v1136 = vmul.f32 %v1134, %v1134
    %v1137 = vmul.f32 %v1135, %v1135
    %v1138 = vsel %vm86, %v1136, 0.0
    %1139 = vadd.xlane.f32.xlu0 %v1138
    %v1140 = vpop.xlane.xlu0 %1139
    %v1141 = vsel %vm86, %v1137, 0.0
    %1142 = vadd.xlane.f32.xlu0 %v1141
    %v1143 = vpop.xlane.xlu0 %1142
    %v1144 = vmul.f32 %v1140, %v1131
    %v1145 = vmul.f32 %v1143, %v1131
    %v1146 = vadd.f32 %v1144, 1e-05
    %v1147 = vadd.f32 %v1145, 1e-05
    %v1148 = vrsqrt.pop %v1146
    %v1149 = vrsqrt.pop %v1147
    %v1150 = vmul.f32 %v1134, %v1148
    %v1151 = vmul.f32 %v1135, %v1149
    %v1153 = vlaneseq
    %v1154 = vshrl.u32 %v1153, 7
    %v1155 = vsub.s32 0, %v1154
    %v1156 = vrot.slane %v1123, %v1155
    %v1158 = vmul.f32 %v1150, %v1156
    %v1159 = vmul.f32 %v1151, %v1156
    %v1161 = vlaneseq
    %v1162 = vshrl.u32 %v1161, 7
    %v1163 = vsub.s32 0, %v1162
    %v1164 = vrot.slane %v1124, %v1163
    %v1166 = vadd.f32 %v1158, %v1164
    %v1167 = vadd.f32 %v1159, %v1164
    %v1168 = vpack.c.bf16 %v1167, %v1166
    %v1169 = vld [vmem:[#allocation2] sm:$0xf]
    %v1170 = vld [vmem:[#allocation2 + $0x4] sm:$0xf]
    %v1171 = vld [vmem:[#allocation2 + $0x8] sm:$0xf]
    %v1172 = vld [vmem:[#allocation2 + $0xc] sm:$0xf]
    %v1173 = vld [vmem:[%s8] sm:$0x1]
    %v1175 = vlaneseq
    %v1176 = vshrl.u32 %v1175, 7
    %v1177 = vsub.s32 0, %v1176
    %v1178 = vrot.slane %v1173, %v1177
    %v1184 = vunpack.c.l.b16 %v1169
    %v1185 = vunpack.c.l.b16 %v1170
    %v1186 = vunpack.c.l.b16 %v1171
    %v1187 = vunpack.c.l.b16 %v1172
    %v1188 = vpack.c.b16 %v1185, %v1184
    %v1189 = vpack.c.b16 %v1187, %v1186
    %v1193 = vsel %vm86, %v1168, 0
    %1195 = vmatprep.subr.bf16.mxu0 0
    %1196 = vmatpush1.bf16.msra.mxu0 %v1188
    %1197 = vmatprep.subr.bf16.mxu0 0
    %1198 = vmatpush1.bf16.msra.mxu0 %v1189
    %1199 = vmatprep.subr.bf16.mxu0 0
    %1200 = vmatpush1.bf16.msra.mxu0 0
    %1201 = vmatprep.subr.bf16.mxu0 0
    %1202 = vmatpush1.bf16.msra.mxu0 0
    %1203 = vmatprep.subr.bf16.mxu0 0
    %1204 = vmatpush1.bf16.msra.mxu0 0
    %1205 = vmatprep.subr.bf16.mxu0 0
    %1206 = vmatpush1.bf16.msra.mxu0 0
    %1207 = vmatprep.subr.bf16.mxu0 0
    %1208 = vmatpush1.bf16.msra.mxu0 0
    %1209 = vmatprep.subr.bf16.mxu0 0
    %1210 = vmatpush1.bf16.msra.mxu0 0
    %1211 = vmatprep.subr.bf16.mxu0 0
    %1212 = vmatpush1.bf16.msra.mxu0 0
    %1213 = vmatprep.subr.bf16.mxu0 0
    %1214 = vmatpush1.bf16.msra.mxu0 0
    %1215 = vmatprep.subr.bf16.mxu0 0
    %1216 = vmatpush1.bf16.msra.mxu0 0
    %1217 = vmatprep.subr.bf16.mxu0 0
    %1218 = vmatpush1.bf16.msra.mxu0 0
    %1219 = vmatprep.subr.bf16.mxu0 0
    %1220 = vmatpush1.bf16.msra.mxu0 0
    %1221 = vmatprep.subr.bf16.mxu0 0
    %1222 = vmatpush1.bf16.msra.mxu0 0
    %1223 = vmatprep.subr.bf16.mxu0 0
    %1224 = vmatpush1.bf16.msra.mxu0 0
    %1225 = vmatprep.subr.bf16.mxu0 0
    %1226 = vmatpush1.bf16.msra.mxu0 0
    %1227 = vmatprep.mubr.bf16.mxu0 0
    %1228 = vmatmul.mubr.bf16.gmra.mrb[0].mxu0 %v1193
    %v1229 = vpop.f32.mrb[0].mxu0
    %v1230 = vadd.f32 %v1178, %v1229
    %v1231 = vpop.f32.mrb[0].mxu0
    %v1232 = vpop.f32.mrb[0].mxu0
    %v1233 = vadd.f32 %v1178, %v1232
    %v1234 = vpop.f32.mrb[0].mxu0
    %1235 = vdwg.mxu0
    %v1236 = vmax.f32 %v1230, 0.0
    %v1237 = vmax.f32 %v1233, 0.0
    %v1238 = vpack.c.bf16 %v1237, %v1236
    %v1239 = vld [vmem:[%s9] sm:$0xf]
    %v1240 = vld [vmem:[%s9 + $0x4] sm:$0xf]
    %v1241 = vld [vmem:[%s9 + $0x8] sm:$0xf]
    %v1242 = vld [vmem:[%s9 + $0xc] sm:$0xf]
    %v1243 = vld [vmem:[%s9 + $0x10] sm:$0xf]
    %v1244 = vld [vmem:[%s9 + $0x14] sm:$0xf]
    %v1245 = vld [vmem:[%s9 + $0x18] sm:$0xf]
    %v1246 = vld [vmem:[%s9 + $0x1c] sm:$0xf]
    %v1247 = vld [vmem:[%s10] sm:$0x1]
    %v1249 = vlaneseq
    %v1250 = vshrl.u32 %v1249, 7
    %v1251 = vsub.s32 0, %v1250
    %v1252 = vrot.slane %v1247, %v1251
    %v1262 = vunpack.c.l.b16 %v1239
    %v1263 = vunpack.c.l.b16 %v1240
    %v1264 = vunpack.c.l.b16 %v1241
    %v1265 = vunpack.c.l.b16 %v1242
    %v1266 = vunpack.c.l.b16 %v1243
    %v1267 = vunpack.c.l.b16 %v1244
    %v1268 = vunpack.c.l.b16 %v1245
    %v1269 = vunpack.c.l.b16 %v1246
    %v1270 = vpack.c.b16 %v1263, %v1262
    %v1271 = vpack.c.b16 %v1265, %v1264
    %v1272 = vpack.c.b16 %v1267, %v1266
    %v1273 = vpack.c.b16 %v1269, %v1268
    %vm1278 = vcmask 523264
    %v1280 = vsel %vm1278, %v1238, 0
    %1282 = vmatprep.subr.bf16.mxu0 0
    %1283 = vmatpush1.bf16.msra.mxu0 %v1270
    %1284 = vmatprep.subr.bf16.mxu0 0
    %1285 = vmatpush1.bf16.msra.mxu0 %v1271
    %1286 = vmatprep.subr.bf16.mxu0 0
    %1287 = vmatpush1.bf16.msra.mxu0 %v1272
    %1288 = vmatprep.subr.bf16.mxu0 0
    %1289 = vmatpush1.bf16.msra.mxu0 %v1273
    %1290 = vmatprep.subr.bf16.mxu0 0
    %1291 = vmatpush1.bf16.msra.mxu0 0
    %1292 = vmatprep.subr.bf16.mxu0 0
    %1293 = vmatpush1.bf16.msra.mxu0 0
    %1294 = vmatprep.subr.bf16.mxu0 0
    %1295 = vmatpush1.bf16.msra.mxu0 0
    %1296 = vmatprep.subr.bf16.mxu0 0
    %1297 = vmatpush1.bf16.msra.mxu0 0
    %1298 = vmatprep.subr.bf16.mxu0 0
    %1299 = vmatpush1.bf16.msra.mxu0 0
    %1300 = vmatprep.subr.bf16.mxu0 0
    %1301 = vmatpush1.bf16.msra.mxu0 0
    %1302 = vmatprep.subr.bf16.mxu0 0
    %1303 = vmatpush1.bf16.msra.mxu0 0
    %1304 = vmatprep.subr.bf16.mxu0 0
    %1305 = vmatpush1.bf16.msra.mxu0 0
    %1306 = vmatprep.subr.bf16.mxu0 0
    %1307 = vmatpush1.bf16.msra.mxu0 0
    %1308 = vmatprep.subr.bf16.mxu0 0
    %1309 = vmatpush1.bf16.msra.mxu0 0
    %1310 = vmatprep.subr.bf16.mxu0 0
    %1311 = vmatpush1.bf16.msra.mxu0 0
    %1312 = vmatprep.subr.bf16.mxu0 0
    %1313 = vmatpush1.bf16.msra.mxu0 0
    %1314 = vmatprep.mubr.bf16.mxu0 0
    %1315 = vmatmul.mubr.bf16.gmra.mrb[0].mxu0 %v1280
    %v1316 = vpop.f32.mrb[0].mxu0
    %v1317 = vadd.f32 %v1252, %v1316
    %v1318 = vpop.f32.mrb[0].mxu0
    %v1319 = vpop.f32.mrb[0].mxu0
    %v1320 = vadd.f32 %v1252, %v1319
    %v1321 = vpop.f32.mrb[0].mxu0
    %1322 = vdwg.mxu0
    %v1323 = vadd.f32 %v1166, %v1317
    %v1324 = vadd.f32 %v1167, %v1320
    %v1325 = vld [vmem:[%s11] sm:$0x1]
    %v1326 = vld [vmem:[%s12] sm:$0x1]
    %v1327 = vsel %vm86, %v1323, 0.0
    %1328 = vadd.xlane.f32.xlu0 %v1327
    %v1329 = vpop.xlane.xlu0 %1328
    %v1330 = vsel %vm86, %v1324, 0.0
    %1331 = vadd.xlane.f32.xlu0 %v1330
    %v1332 = vpop.xlane.xlu0 %1331
    %v1333 = vmul.f32 %v1329, %v1131
    %v1334 = vmul.f32 %v1332, %v1131
    %v1335 = vsub.f32 %v1323, %v1333
    %v1336 = vsub.f32 %v1324, %v1334
    %v1337 = vmul.f32 %v1335, %v1335
    %v1338 = vmul.f32 %v1336, %v1336
    %v1339 = vsel %vm86, %v1337, 0.0
    %1340 = vadd.xlane.f32.xlu0 %v1339
    %v1341 = vpop.xlane.xlu0 %1340
    %v1342 = vsel %vm86, %v1338, 0.0
    %1343 = vadd.xlane.f32.xlu0 %v1342
    %v1344 = vpop.xlane.xlu0 %1343
    %v1345 = vmul.f32 %v1341, %v1131
    %v1346 = vmul.f32 %v1344, %v1131
    %v1347 = vadd.f32 %v1345, 1e-05
    %v1348 = vadd.f32 %v1346, 1e-05
    %v1349 = vrsqrt.pop %v1347
    %v1350 = vrsqrt.pop %v1348
    %v1351 = vmul.f32 %v1335, %v1349
    %v1352 = vmul.f32 %v1336, %v1350
    %v1354 = vlaneseq
    %v1355 = vshrl.u32 %v1354, 7
    %v1356 = vsub.s32 0, %v1355
    %v1357 = vrot.slane %v1325, %v1356
    %v1359 = vmul.f32 %v1351, %v1357
    %v1360 = vmul.f32 %v1352, %v1357
    %v1362 = vlaneseq
    %v1363 = vshrl.u32 %v1362, 7
    %v1364 = vsub.s32 0, %v1363
    %v1365 = vrot.slane %v1326, %v1364
    %v1367 = vadd.f32 %v1359, %v1365
    %v1368 = vadd.f32 %v1360, %v1365
    %1369 = vst.msk [vmem:[#allocation5] sm:$0xff] %vm86, %v1367
    %1370 = vst.msk [vmem:[#allocation5 + $0x8] sm:$0xff] %vm86, %v1368
    // Predicated region
    $region58: #{tpu_custom_call.1} parent=1 // pred_check
      _
    $region59: #{tpu_custom_call.1} parent=1 // pred_check_branch
      %1372 = sbr.rel (0) target = $region61
    $region60: #{tpu_custom_call.1} parent=1 // pred_region
      %s1374 = ssub.s32 256, 256
      %1375 = vsyncadd [#allocation4], %s1374
      %s1376 = sshll.u32 [#allocation5], 4
      %s1377 = int_to_ptr.vmem [resolvable:$true] %s1376
      %1382 = dma.vmem_to_hbm [thread:$0]  %s1377, 256, %s13, [#allocation4], 128, 128, 8
    $region61: #{tpu_custom_call.1} parent=1 // pred_fallthru
      _
    // Predicated region
    $region62: #{tpu_custom_call.1} parent=1 // pred_check
      _
    $region63: #{tpu_custom_call.1} parent=1 // pred_check_branch
      %1384 = sbr.rel (0) target = $region65
    $region64: #{tpu_custom_call.1} parent=1 // pred_region
      %1385 = dma.done [#allocation4], 256
    $region65: #{tpu_custom_call.1} parent=1 // pred_fallthru
      _
    %1386 = vsyncpa [#allocation3], 1
    %1387 = vsyncpa [#allocation4], 1

</llo_original>
